<compile_context>
chip_gen: v6e
topology: v6e:2x2x1
jax: 0.10.0
libtpu: 0.0.40
codegen_flags: <defaults>
</compile_context>

<pallas_src>
import math
import functools

import jax
import jax.numpy as jnp
from jax.experimental import pallas as pl
from jax.experimental.pallas import tpu as pltpu


# ----------------------------- Pallas kernel --------------------------------

def _mhatt_kernel(q_ref, k_ref, v_ref, bias_ref, wm_ref, bm_ref,
                  out_ref, *att_refs, group, head_dim):
    """One grid step == (one batch element, one query tile, one head group)."""
    G, hd = group, head_dim
    Tq = q_ref.shape[2]                 # query-tile length
    S = k_ref.shape[2]                  # key length
    H = out_ref.shape[2]                # model width
    f32 = jnp.float32
    cdt = q_ref.dtype                   # MXU operand dtype (bf16 or f32)
    g = pl.program_id(2)                # head-group axis (innermost, accumulation)

    qg = q_ref[0]                       # (G, Tq, hd)   1/sqrt(hd) already folded in
    kg = k_ref[0]                       # (G, S,  hd)
    vg = v_ref[0]                       # (G, S,  hd)

    # ---- scores: batched over packed heads, contracting hd directly (no .T,
    #      no XLU transpose); f32 accumulation on the MXU.
    scores = jnp.einsum('gqd,gkd->gqk', qg, kg,
                        preferred_element_type=f32)                  # (G, Tq, S)
    scores = scores + bias_ref[0]       # additive -1e9 key-padding bias, (1, S)

    # ---- numerically stable softmax over keys (f32, exact normalization so
    #      the stored att_map rows sum to 1).
    m = jnp.max(scores, axis=-1, keepdims=True)
    e = jnp.exp(scores - m)
    att = e * pl.reciprocal(jnp.sum(e, axis=-1, keepdims=True))      # (G, Tq, S)

    if att_refs:                        # att_map output requested
        att_refs[0][...] = att.reshape(1, G, Tq, S).astype(att_refs[0].dtype)

    # ---- context per packed head (batched MXU matmul, f32 accumulation).
    ctx = jnp.einsum('gqk,gkd->gqd', att.astype(cdt), vg,
                     preferred_element_type=f32)                     # (G, Tq, hd)

    # ---- fused merge for the group: sum_h ctx[h] @ Wm[head g*G + h].
    #      wm_ref holds the full (NH, hd, H) merge weight resident in VMEM.
    merged = None
    for h in range(G):                  # G is small & static (unrolled)
        w_h = wm_ref[g * G + h]                                      # (hd, H)
        part = jnp.dot(ctx[h].astype(cdt), w_h,
                       preferred_element_type=f32)                   # (Tq, H)
        merged = part if merged is None else merged + part

    # ---- accumulate across the head-group grid axis; the output block stays
    #      resident in VMEM for the whole group loop.  Init with merge bias.
    @pl.when(g == 0)
    def _():
        out_ref[...] = jnp.broadcast_to(
            bm_ref[...].reshape(1, 1, H), (1, Tq, H)).astype(out_ref.dtype)

    out_ref[...] += merged.reshape(1, Tq, H).astype(out_ref.dtype)


# ------------------------------ JAX wrapper ----------------------------------

def mhatt_forward(v, k, q, mask, params, *, num_heads,
                  compute_dtype=jnp.bfloat16, att_dtype=jnp.float32,
                  return_att_map=True, block_q=None, head_group=None,
                  vmem_limit_bytes=None):
    """Pallas MHAtt forward.

    v, k, q: (B, S, H); mask: (B, 1, S) float (1.0 == masked key position).
    Returns (atted (B,S,H) f32, att_map (B,NH,S,S) att_dtype) or just atted
    when return_att_map=False.
    """
    B, S, H = q.shape
    hd = H // num_heads
    assert H == num_heads * hd
    assert mask.shape == (B, 1, S)
    f32 = jnp.float32
    cdt = compute_dtype

    # ---- head packing: G heads per grid step so G*hd ~ MXU width (<= 256).
    if head_group is None:
        head_group = 1
        for d in range(1, num_heads + 1):
            if num_heads % d == 0 and d * hd <= 256:
                head_group = d
    G = head_group
    assert num_heads % G == 0
    n_groups = num_heads // G

    # ---- query tiling: full S for short sequences; bounded tiles for long S
    #      (keeps the (G, block_q, S) score/att tiles VMEM-friendly on v7x;
    #      v6e's 128 MiB VMEM can take block_q=512 via the explicit argument).
    if block_q is None:
        if S <= 512:
            block_q = S
        elif S % 256 == 0:
            block_q = 256
        elif S % 128 == 0:
            block_q = 128
        else:
            block_q = S
    assert S % block_q == 0
    sub = 16 if (cdt == jnp.bfloat16 or att_dtype == jnp.bfloat16) else 8
    assert block_q == S or block_q % sub == 0, "block_q must match sublane packing"

    # ---- hoisted input projections: one-time XLA GEMMs (no per-tile K/V
    #      re-projection inside the kernel); 1/sqrt(hd) folded into Q.
    scale = 1.0 / math.sqrt(hd)

    def project(x, w, b):
        return x.astype(f32) @ w.astype(f32) + b.astype(f32)         # (B, S, H)

    def to_heads(x):                                                  # -> (B, NH, S, hd)
        return x.reshape(B, S, num_heads, hd).transpose(0, 2, 1, 3).astype(cdt)

    qh = to_heads(project(q, params["wq"], params["bq"]) * scale)
    kh = to_heads(project(k, params["wk"], params["bk"]))
    vh = to_heads(project(v, params["wv"], params["bv"]))

    # ---- additive mask bias precomputed once in the wrapper.
    neg_bias = jnp.where(mask.astype(f32) > 0.0,
                         jnp.float32(-1e9), jnp.float32(0.0))         # (B, 1, S)

    # ---- head-major merge weight (NH, hd, H), fully VMEM-resident in-kernel.
    wm3 = params["wm"].reshape(num_heads, hd, H).astype(cdt)
    bm = params["bm"].astype(f32)                                     # (1, H)

    grid = (B, S // block_q, n_groups)

    q_spec = pl.BlockSpec((1, G, block_q, hd), lambda b, t, g: (b, g, t, 0))
    kv_spec = pl.BlockSpec((1, G, S, hd), lambda b, t, g: (b, g, 0, 0))
    bias_spec = pl.BlockSpec((1, 1, S), lambda b, t, g: (b, 0, 0))
    wm_spec = pl.BlockSpec((num_heads, hd, H), lambda b, t, g: (0, 0, 0))  # resident
    bm_spec = pl.BlockSpec((1, H), lambda b, t, g: (0, 0))

    out_specs = [pl.BlockSpec((1, block_q, H), lambda b, t, g: (b, t, 0))]  # accum over g
    out_shapes = [jax.ShapeDtypeStruct((B, S, H), jnp.float32)]
    if return_att_map:
        out_specs.append(
            pl.BlockSpec((1, G, block_q, S), lambda b, t, g: (b, g, t, 0)))
        out_shapes.append(
            jax.ShapeDtypeStruct((B, num_heads, S, S), att_dtype))

    kernel = functools.partial(_mhatt_kernel, group=G, head_dim=hd)

    outs = pl.pallas_call(
        kernel,
        grid_spec=pltpu.PrefetchScalarGridSpec(
            num_scalar_prefetch=0,
            grid=grid,
            in_specs=[q_spec, kv_spec, kv_spec, bias_spec, wm_spec, bm_spec],
            out_specs=tuple(out_specs)),
        out_shape=tuple(out_shapes),
        compiler_params=pltpu.CompilerParams(
            dimension_semantics=("parallel", "parallel", "arbitrary"),
            vmem_limit_bytes=vmem_limit_bytes),
    )(qh, kh, vh, neg_bias, wm3, bm)

    if return_att_map:
        return outs[0], outs[1]
    return outs[0]


# ------------------------- pure-JAX reference check --------------------------

def mhatt_reference(v, k, q, mask, params, *, num_heads):
    B, S, H = q.shape
    hd = H // num_heads

    def proj(x, w, b):
        return x @ w + b[0]

    def split(x):  # (B,S,H) -> (B,NH,S,hd)
        return x.reshape(B, S, num_heads, hd).transpose(0, 2, 1, 3)

    qp = split(proj(q, params["wq"], params["bq"]))
    kp = split(proj(k, params["wk"], params["bk"]))
    vp = split(proj(v, params["wv"], params["bv"]))

    scores = jnp.einsum("bhqd,bhkd->bhqk", qp, kp) / math.sqrt(hd)
    scores = jnp.where(mask[:, None, :, :] > 0.0, -1e9, scores)
    att = jax.nn.softmax(scores, axis=-1)
    ctx = jnp.einsum("bhqk,bhkd->bhqd", att, vp)
    ctx = ctx.transpose(0, 2, 1, 3).reshape(B, S, H)
    out = ctx @ params["wm"] + params["bm"][0]
    return out, att


# ---------------------------------- main --------------------------------------

if __name__ == "__main__":
    # Small config consistent with the module: HIDDEN_SIZE=32, MULTI_HEAD=4,
    # HIDDEN_SIZE_HEAD=8, batch=2, seq=8.
    B, S, H, NH = 2, 8, 32, 4

    key = jax.random.PRNGKey(0)
    keys = jax.random.split(key, 12)

    bound = 1.0 / math.sqrt(H)  # nn.Linear default init range (deterministic synthetic init)
    params = {
        "wq": jax.random.uniform(keys[0], (H, H), jnp.float32, -bound, bound),
        "bq": jax.random.uniform(keys[1], (1, H), jnp.float32, -bound, bound),
        "wk": jax.random.uniform(keys[2], (H, H), jnp.float32, -bound, bound),
        "bk": jax.random.uniform(keys[3], (1, H), jnp.float32, -bound, bound),
        "wv": jax.random.uniform(keys[4], (H, H), jnp.float32, -bound, bound),
        "bv": jax.random.uniform(keys[5], (1, H), jnp.float32, -bound, bound),
        "wm": jax.random.uniform(keys[6], (H, H), jnp.float32, -bound, bound),
        "bm": jax.random.uniform(keys[7], (1, H), jnp.float32, -bound, bound),
    }

    q = jax.random.normal(keys[8], (B, S, H), jnp.float32)
    k = jax.random.normal(keys[9], (B, S, H), jnp.float32)
    v = jax.random.normal(keys[10], (B, S, H), jnp.float32)
    # key-padding mask: mask out the last 2 positions of batch element 1
    mask = jnp.zeros((B, 1, S), jnp.float32).at[1, 0, -2:].set(1.0)

    ref_atted, ref_att = mhatt_reference(v, k, q, mask, params, num_heads=NH)

    # ---- f32-compute path: tight check (exact softmax normalization).
    atted, att_map = mhatt_forward(v, k, q, mask, params, num_heads=NH,
                                   compute_dtype=jnp.float32)
    atted = jax.block_until_ready(atted)
    att_map = jax.block_until_ready(att_map)
    assert atted.shape == (B, S, H) and att_map.shape == (B, NH, S, S)
    err_o = jnp.max(jnp.abs(atted - ref_atted))
    err_a = jnp.max(jnp.abs(att_map - ref_att))
    assert jnp.allclose(atted, ref_atted, atol=5e-3, rtol=5e-3), f"atted err={err_o}"
    assert jnp.allclose(att_map, ref_att, atol=5e-3, rtol=5e-3), f"att err={err_a}"

    # ---- default bf16 MXU-operand path (v6e/v7x), opt-in bf16 att_map stream.
    atted16, att16 = mhatt_forward(v, k, q, mask, params, num_heads=NH,
                                   att_dtype=jnp.bfloat16)
    atted16 = jax.block_until_ready(atted16)
    att16 = jax.block_until_ready(att16)
    err_o16 = jnp.max(jnp.abs(atted16 - ref_atted))
    err_a16 = jnp.max(jnp.abs(att16.astype(jnp.float32) - ref_att))
    assert jnp.allclose(atted16, ref_atted, atol=5e-2, rtol=5e-2), f"bf16 atted err={err_o16}"
    assert jnp.allclose(att16.astype(jnp.float32), ref_att, atol=5e-2, rtol=5e-2), \
        f"bf16 att err={err_a16}"

    # ---- atted-only path (skips the O(B*NH*S^2) att_map HBM stream entirely).
    atted_only = mhatt_forward(v, k, q, mask, params, num_heads=NH,
                               compute_dtype=jnp.float32, return_att_map=False)
    atted_only = jax.block_until_ready(atted_only)
    err_no = jnp.max(jnp.abs(atted_only - ref_atted))
    assert jnp.allclose(atted_only, ref_atted, atol=5e-3, rtol=5e-3), \
        f"no-att atted err={err_no}"

    print("KERNEL_OK")
</pallas_src>

<mosaic_0001>
module attributes {stable_mosaic.version = 11 : i64} {
  func.func @_mhatt_kernel(%arg0: i32, %arg1: i32, %arg2: i32, %arg3: memref<1x4x8x8xf32, #tpu.memory_space<vmem>>, %arg4: memref<1x4x8x8xf32, #tpu.memory_space<vmem>>, %arg5: memref<1x4x8x8xf32, #tpu.memory_space<vmem>>, %arg6: memref<1x1x8xf32, #tpu.memory_space<vmem>>, %arg7: memref<4x8x32xf32, #tpu.memory_space<vmem>>, %arg8: memref<1x32xf32, #tpu.memory_space<vmem>>, %arg9: memref<1x8x32xf32, #tpu.memory_space<vmem>>, %arg10: memref<1x4x8x8xf32, #tpu.memory_space<vmem>>) attributes {dimension_semantics = [#tpu.dimension_semantics<parallel>, #tpu.dimension_semantics<parallel>, #tpu.dimension_semantics<arbitrary>], iteration_bounds = array<i64: 2, 1, 1>, scalar_prefetch = 0 : i64, scratch_operands = 0 : i64, tpu.core_type = #tpu.core_type<tc>, window_params = [{transform_indices = @transform_0, window_bounds = array<i64: 1, 4, 8, 8>}, {transform_indices = @transform_1, window_bounds = array<i64: 1, 4, 8, 8>}, {transform_indices = @transform_2, window_bounds = array<i64: 1, 4, 8, 8>}, {transform_indices = @transform_3, window_bounds = array<i64: 1, 1, 8>}, {pipeline_mode = #tpu.pipeline_mode<synchronous>, transform_indices = @transform_4, window_bounds = array<i64: 4, 8, 32>}, {pipeline_mode = #tpu.pipeline_mode<synchronous>, transform_indices = @transform_5, window_bounds = array<i64: 1, 32>}, {transform_indices = @transform_6, window_bounds = array<i64: 1, 8, 32>}, {transform_indices = @transform_7, window_bounds = array<i64: 1, 4, 8, 8>}]} {
    %c0 = arith.constant 0 : index
    %c0_0 = arith.constant 0 : index
    %c0_1 = arith.constant 0 : index
    %c0_2 = arith.constant 0 : index
    %0 = vector.load %arg3[%c0, %c0_0, %c0_1, %c0_2] : memref<1x4x8x8xf32, #tpu.memory_space<vmem>>, vector<1x4x8x8xf32>
    %1 = vector.shape_cast %0 : vector<1x4x8x8xf32> to vector<4x8x8xf32>
    %c0_3 = arith.constant 0 : index
    %c0_4 = arith.constant 0 : index
    %c0_5 = arith.constant 0 : index
    %c0_6 = arith.constant 0 : index
    %2 = vector.load %arg4[%c0_3, %c0_4, %c0_5, %c0_6] : memref<1x4x8x8xf32, #tpu.memory_space<vmem>>, vector<1x4x8x8xf32>
    %3 = vector.shape_cast %2 : vector<1x4x8x8xf32> to vector<4x8x8xf32>
    %c0_7 = arith.constant 0 : index
    %c0_8 = arith.constant 0 : index
    %c0_9 = arith.constant 0 : index
    %c0_10 = arith.constant 0 : index
    %4 = vector.load %arg5[%c0_7, %c0_8, %c0_9, %c0_10] : memref<1x4x8x8xf32, #tpu.memory_space<vmem>>, vector<1x4x8x8xf32>
    %5 = vector.shape_cast %4 : vector<1x4x8x8xf32> to vector<4x8x8xf32>
    "tpu.trace_start"() <{level = 10 : i32, message = "gqd,gkd->gqk"}> : () -> ()
    %cst = arith.constant dense<0.000000e+00> : vector<4x8x8xf32>
    %6 = tpu.matmul %1, %3, %cst {dimension_numbers = #tpu.dot_dimension_numbers<[2], [2], [1], [1], [0, 0, 0, 1, 1, 1], [0], [0]>} : vector<4x8x8xf32>, vector<4x8x8xf32>, vector<4x8x8xf32> -> vector<4x8x8xf32>
    "tpu.trace_stop"() : () -> ()
    %c0_11 = arith.constant 0 : index
    %c0_12 = arith.constant 0 : index
    %c0_13 = arith.constant 0 : index
    %7 = vector.load %arg6[%c0_11, %c0_12, %c0_13] : memref<1x1x8xf32, #tpu.memory_space<vmem>>, vector<1x1x8xf32>
    %8 = vector.shape_cast %7 : vector<1x1x8xf32> to vector<1x8xf32>
    %9 = vector.shape_cast %8 : vector<1x8xf32> to vector<1x1x8xf32>
    %10 = vector.broadcast %9 : vector<1x1x8xf32> to vector<4x8x8xf32>
    %11 = arith.addf %6, %10 : vector<4x8x8xf32>
    %cst_14 = arith.constant dense<0xFF800000> : vector<4x8xf32>
    %12 = vector.multi_reduction <maximumf>, %11, %cst_14 [2] : vector<4x8x8xf32> to vector<4x8xf32>
    %13 = vector.shape_cast %12 : vector<4x8xf32> to vector<4x8x1xf32>
    %14 = vector.broadcast %13 : vector<4x8x1xf32> to vector<4x8x8xf32>
    %15 = arith.subf %11, %14 : vector<4x8x8xf32>
    %16 = math.exp %15 : vector<4x8x8xf32>
    %cst_15 = arith.constant dense<0.000000e+00> : vector<4x8xf32>
    %17 = vector.multi_reduction <add>, %16, %cst_15 [2] : vector<4x8x8xf32> to vector<4x8xf32>
    %18 = vector.shape_cast %17 : vector<4x8xf32> to vector<4x8x1xf32>
    %19 = tpu.reciprocal %18 : vector<4x8x1xf32> -> vector<4x8x1xf32>
    %20 = vector.broadcast %19 : vector<4x8x1xf32> to vector<4x8x8xf32>
    %21 = arith.mulf %16, %20 : vector<4x8x8xf32>
    %22 = vector.shape_cast %21 : vector<4x8x8xf32> to vector<1x4x8x8xf32>
    %c0_16 = arith.constant 0 : index
    %c0_17 = arith.constant 0 : index
    %c0_18 = arith.constant 0 : index
    %c0_19 = arith.constant 0 : index
    %23 = vector.load %arg10[%c0_16, %c0_17, %c0_18, %c0_19] : memref<1x4x8x8xf32, #tpu.memory_space<vmem>>, vector<1x4x8x8xf32>
    tpu.vector_store %arg10[%c0_16, %c0_17, %c0_18, %c0_19], %22 {strides = array<i32>} : memref<1x4x8x8xf32, #tpu.memory_space<vmem>>, vector<1x4x8x8xf32>,
    "tpu.trace_start"() <{level = 10 : i32, message = "gqk,gkd->gqd"}> : () -> ()
    %cst_20 = arith.constant dense<0.000000e+00> : vector<4x8x8xf32>
    %24 = tpu.matmul %21, %5, %cst_20 {dimension_numbers = #tpu.dot_dimension_numbers<[2], [1], [1], [2], [0, 0, 0, 1, 1, 2], [0], [0]>} : vector<4x8x8xf32>, vector<4x8x8xf32>, vector<4x8x8xf32> -> vector<4x8x8xf32>
    "tpu.trace_stop"() : () -> ()
    %c4_i32 = arith.constant 4 : i32
    %25 = arith.muli %arg2, %c4_i32 : i32
    %c0_i32 = arith.constant 0 : i32
    %26 = arith.addi %25, %c0_i32 : i32
    %27 = arith.index_cast %26 : i32 to index
    %c0_21 = arith.constant 0 : index
    %c0_22 = arith.constant 0 : index
    %28 = vector.load %arg7[%27, %c0_21, %c0_22] : memref<4x8x32xf32, #tpu.memory_space<vmem>>, vector<1x8x32xf32>
    %29 = vector.shape_cast %28 : vector<1x8x32xf32> to vector<8x32xf32>
    %30 = vector.extract_strided_slice %24 {offsets = [0, 0, 0], sizes = [1, 8, 8], strides = [1, 1, 1]} : vector<4x8x8xf32> to vector<1x8x8xf32>
    %31 = vector.shape_cast %30 : vector<1x8x8xf32> to vector<8x8xf32>
    %cst_23 = arith.constant dense<0.000000e+00> : vector<8x32xf32>
    %32 = tpu.matmul %31, %29, %cst_23 {dimension_numbers = #tpu.dot_dimension_numbers<[1], [0], [0], [1], [0, 0, 1, 1], [], []>} : vector<8x8xf32>, vector<8x32xf32>, vector<8x32xf32> -> vector<8x32xf32>
    %c4_i32_24 = arith.constant 4 : i32
    %33 = arith.muli %arg2, %c4_i32_24 : i32
    %c1_i32 = arith.constant 1 : i32
    %34 = arith.addi %33, %c1_i32 : i32
    %35 = arith.index_cast %34 : i32 to index
    %c0_25 = arith.constant 0 : index
    %c0_26 = arith.constant 0 : index
    %36 = vector.load %arg7[%35, %c0_25, %c0_26] : memref<4x8x32xf32, #tpu.memory_space<vmem>>, vector<1x8x32xf32>
    %37 = vector.shape_cast %36 : vector<1x8x32xf32> to vector<8x32xf32>
    %38 = vector.extract_strided_slice %24 {offsets = [1, 0, 0], sizes = [1, 8, 8], strides = [1, 1, 1]} : vector<4x8x8xf32> to vector<1x8x8xf32>
    %39 = vector.shape_cast %38 : vector<1x8x8xf32> to vector<8x8xf32>
    %cst_27 = arith.constant dense<0.000000e+00> : vector<8x32xf32>
    %40 = tpu.matmul %39, %37, %cst_27 {dimension_numbers = #tpu.dot_dimension_numbers<[1], [0], [0], [1], [0, 0, 1, 1], [], []>} : vector<8x8xf32>, vector<8x32xf32>, vector<8x32xf32> -> vector<8x32xf32>
    %41 = arith.addf %32, %40 : vector<8x32xf32>
    %c4_i32_28 = arith.constant 4 : i32
    %42 = arith.muli %arg2, %c4_i32_28 : i32
    %c2_i32 = arith.constant 2 : i32
    %43 = arith.addi %42, %c2_i32 : i32
    %44 = arith.index_cast %43 : i32 to index
    %c0_29 = arith.constant 0 : index
    %c0_30 = arith.constant 0 : index
    %45 = vector.load %arg7[%44, %c0_29, %c0_30] : memref<4x8x32xf32, #tpu.memory_space<vmem>>, vector<1x8x32xf32>
    %46 = vector.shape_cast %45 : vector<1x8x32xf32> to vector<8x32xf32>
    %47 = vector.extract_strided_slice %24 {offsets = [2, 0, 0], sizes = [1, 8, 8], strides = [1, 1, 1]} : vector<4x8x8xf32> to vector<1x8x8xf32>
    %48 = vector.shape_cast %47 : vector<1x8x8xf32> to vector<8x8xf32>
    %cst_31 = arith.constant dense<0.000000e+00> : vector<8x32xf32>
    %49 = tpu.matmul %48, %46, %cst_31 {dimension_numbers = #tpu.dot_dimension_numbers<[1], [0], [0], [1], [0, 0, 1, 1], [], []>} : vector<8x8xf32>, vector<8x32xf32>, vector<8x32xf32> -> vector<8x32xf32>
    %50 = arith.addf %41, %49 : vector<8x32xf32>
    %c4_i32_32 = arith.constant 4 : i32
    %51 = arith.muli %arg2, %c4_i32_32 : i32
    %c3_i32 = arith.constant 3 : i32
    %52 = arith.addi %51, %c3_i32 : i32
    %53 = arith.index_cast %52 : i32 to index
    %c0_33 = arith.constant 0 : index
    %c0_34 = arith.constant 0 : index
    %54 = vector.load %arg7[%53, %c0_33, %c0_34] : memref<4x8x32xf32, #tpu.memory_space<vmem>>, vector<1x8x32xf32>
    %55 = vector.shape_cast %54 : vector<1x8x32xf32> to vector<8x32xf32>
    %56 = vector.extract_strided_slice %24 {offsets = [3, 0, 0], sizes = [1, 8, 8], strides = [1, 1, 1]} : vector<4x8x8xf32> to vector<1x8x8xf32>
    %57 = vector.shape_cast %56 : vector<1x8x8xf32> to vector<8x8xf32>
    %cst_35 = arith.constant dense<0.000000e+00> : vector<8x32xf32>
    %58 = tpu.matmul %57, %55, %cst_35 {dimension_numbers = #tpu.dot_dimension_numbers<[1], [0], [0], [1], [0, 0, 1, 1], [], []>} : vector<8x8xf32>, vector<8x32xf32>, vector<8x32xf32> -> vector<8x32xf32>
    %59 = arith.addf %50, %58 : vector<8x32xf32>
    %c0_i32_36 = arith.constant 0 : i32
    %60 = arith.cmpi eq, %arg2, %c0_i32_36 : i32
    %61 = arith.extui %60 : i1 to i32
    %c0_i32_37 = arith.constant 0 : i32
    %62 = arith.cmpi ne, %61, %c0_i32_37 : i32
    scf.if %62 {
      %c0_44 = arith.constant 0 : index
      %c0_45 = arith.constant 0 : index
      %67 = vector.load %arg8[%c0_44, %c0_45] : memref<1x32xf32, #tpu.memory_space<vmem>>, vector<1x32xf32>
      %68 = vector.shape_cast %67 : vector<1x32xf32> to vector<1x1x32xf32>
      %69 = vector.shape_cast %68 : vector<1x1x32xf32> to vector<1x1x32xf32>
      %70 = vector.broadcast %69 : vector<1x1x32xf32> to vector<1x8x32xf32>
      %c0_46 = arith.constant 0 : index
      %c0_47 = arith.constant 0 : index
      %c0_48 = arith.constant 0 : index
      %71 = vector.load %arg9[%c0_46, %c0_47, %c0_48] : memref<1x8x32xf32, #tpu.memory_space<vmem>>, vector<1x8x32xf32>
      tpu.vector_store %arg9[%c0_46, %c0_47, %c0_48], %70 {strides = array<i32>} : memref<1x8x32xf32, #tpu.memory_space<vmem>>, vector<1x8x32xf32>,
    } else {
    }
    %c0_38 = arith.constant 0 : index
    %c0_39 = arith.constant 0 : index
    %c0_40 = arith.constant 0 : index
    %63 = vector.load %arg9[%c0_38, %c0_39, %c0_40] : memref<1x8x32xf32, #tpu.memory_space<vmem>>, vector<1x8x32xf32>
    %64 = vector.shape_cast %59 : vector<8x32xf32> to vector<1x8x32xf32>
    %65 = arith.addf %63, %64 : vector<1x8x32xf32>
    %c0_41 = arith.constant 0 : index
    %c0_42 = arith.constant 0 : index
    %c0_43 = arith.constant 0 : index
    %66 = vector.load %arg9[%c0_41, %c0_42, %c0_43] : memref<1x8x32xf32, #tpu.memory_space<vmem>>, vector<1x8x32xf32>
    tpu.vector_store %arg9[%c0_41, %c0_42, %c0_43], %65 {strides = array<i32>} : memref<1x8x32xf32, #tpu.memory_space<vmem>>, vector<1x8x32xf32>,
    return
  }
  func.func @transform_0(%arg0: i32, %arg1: i32, %arg2: i32) -> (i32, i32, i32, i32) {
    %c0_i32 = arith.constant 0 : i32
    %c0_i32_0 = arith.constant 0 : i32
    return %arg0, %arg2, %arg1, %c0_i32 : i32, i32, i32, i32
  }
  func.func @transform_1(%arg0: i32, %arg1: i32, %arg2: i32) -> (i32, i32, i32, i32) {
    %c0_i32 = arith.constant 0 : i32
    %c0_i32_0 = arith.constant 0 : i32
    %c0_i32_1 = arith.constant 0 : i32
    return %arg0, %arg2, %c0_i32, %c0_i32_0 : i32, i32, i32, i32
  }
  func.func @transform_2(%arg0: i32, %arg1: i32, %arg2: i32) -> (i32, i32, i32, i32) {
    %c0_i32 = arith.constant 0 : i32
    %c0_i32_0 = arith.constant 0 : i32
    %c0_i32_1 = arith.constant 0 : i32
    return %arg0, %arg2, %c0_i32, %c0_i32_0 : i32, i32, i32, i32
  }
  func.func @transform_3(%arg0: i32, %arg1: i32, %arg2: i32) -> (i32, i32, i32) {
    %c0_i32 = arith.constant 0 : i32
    %c0_i32_0 = arith.constant 0 : i32
    %c0_i32_1 = arith.constant 0 : i32
    return %arg0, %c0_i32, %c0_i32_0 : i32, i32, i32
  }
  func.func @transform_4(%arg0: i32, %arg1: i32, %arg2: i32) -> (i32, i32, i32) {
    %c0_i32 = arith.constant 0 : i32
    %c0_i32_0 = arith.constant 0 : i32
    %c0_i32_1 = arith.constant 0 : i32
    %c0_i32_2 = arith.constant 0 : i32
    return %c0_i32, %c0_i32_0, %c0_i32_1 : i32, i32, i32
  }
  func.func @transform_5(%arg0: i32, %arg1: i32, %arg2: i32) -> (i32, i32) {
    %c0_i32 = arith.constant 0 : i32
    %c0_i32_0 = arith.constant 0 : i32
    %c0_i32_1 = arith.constant 0 : i32
    return %c0_i32, %c0_i32_0 : i32, i32
  }
  func.func @transform_6(%arg0: i32, %arg1: i32, %arg2: i32) -> (i32, i32, i32) {
    %c0_i32 = arith.constant 0 : i32
    %c0_i32_0 = arith.constant 0 : i32
    return %arg0, %arg1, %c0_i32 : i32, i32, i32
  }
  func.func @transform_7(%arg0: i32, %arg1: i32, %arg2: i32) -> (i32, i32, i32, i32) {
    %c0_i32 = arith.constant 0 : i32
    %c0_i32_0 = arith.constant 0 : i32
    return %arg0, %arg2, %arg1, %c0_i32 : i32, i32, i32, i32
  }
}

</mosaic_0001>

<llo_original>
// kernel: tpu_custom_call.1
$region0: #{tpu_custom_call.1}
  #allocation0 [shape = 'u32[]', space=smem, size = 0x4, offset = 0x4, fixed_abs, tag = 'smem constant byte address 0x4 - core index']
  #allocation1 [shape = 'u32[144,128]{1,0:T(1,128)}', space=vmem, size = 0x12000, scoped, tag = 'internal scratch']
  %s0 = inlined_call_operand.hbm [shape: f32[2,4,8,8], index: 0, kind: input, shape index: {}]
  %s1 = inlined_call_operand.hbm [shape: f32[2,4,8,8], index: 1, kind: input, shape index: {}]
  %s2 = inlined_call_operand.hbm [shape: f32[2,4,8,8], index: 2, kind: input, shape index: {}]
  %s3 = inlined_call_operand.vmem [shape: f32[2,1,8], index: 3, kind: input, shape index: {}]
  %s4 = inlined_call_operand.hbm [shape: f32[4,8,32], index: 4, kind: input, shape index: {}]
  %s5 = inlined_call_operand.vmem [shape: f32[1,32], index: 5, kind: input, shape index: {}]
  %s6 = inlined_call_operand.hbm [shape: f32[2,8,32], index: 6, kind: output, shape index: {0}]
  %s7 = inlined_call_operand.hbm [shape: f32[2,4,8,8], index: 7, kind: output, shape index: {1}]
  %8 = xla_tuple %s6, %s7
  %s9 = sld [smem:[#allocation0]]
  $region85: #{tpu_custom_call.1} parent=0
    _
  %s11 = ssub.s32 1, %s9
  %s12 = scalar_select 0, %s11, %s9
  $region1: #{tpu_custom_call.1} parent=0
    #allocation2 [shape = 'u8[32768]{0}', space=vmem, size = 0x8000, scoped, tag = 'input window, operand 0']
    #allocation3 [shape = 's32[2]{0}', space=sflag, size = 0x8, scoped, tag = 'scoped memory for tpu_custom_call.1']
    #allocation4 [shape = 's32[2]{0}', space=sflag, size = 0x8, scoped, tag = 'scoped memory for tpu_custom_call.1']
    #allocation5 [shape = 'u8[32768]{0}', space=vmem, size = 0x8000, scoped, tag = 'input window, operand 1']
    #allocation6 [shape = 's32[2]{0}', space=sflag, size = 0x8, scoped, tag = 'scoped memory for tpu_custom_call.1']
    #allocation7 [shape = 'u8[32768]{0}', space=vmem, size = 0x8000, scoped, tag = 'input window, operand 2']
    #allocation8 [shape = 'u8[16384]{0}', space=vmem, size = 0x4000, scoped, tag = 'input window, operand 4, single buffered']
    #allocation9 [shape = 's32[1]{0}', space=sflag, size = 0x4, scoped, tag = 'scoped memory for tpu_custom_call.1']
    #allocation10 [shape = 'u8[8192]{0}', space=vmem, size = 0x2000, scoped, tag = 'output window, operand 0']
    #allocation11 [shape = 'u8[32768]{0}', space=vmem, size = 0x8000, scoped, tag = 'output window, operand 1']
    #allocation12 [shape = 's32[2]{0}', space=sflag, size = 0x8, scoped, tag = 'scoped memory for tpu_custom_call.1']
    %13 = vsyncpa [#allocation3], 0
    %s14 = scalar_lea.sflag [#allocation3], 1
    %15 = vsyncpa %s14, 0
    %16 = vsyncpa [#allocation6], 0
    %s17 = scalar_lea.sflag [#allocation6], 1
    %18 = vsyncpa %s17, 0
    %19 = vsyncpa [#allocation9], 0
    %20 = vsyncpa [#allocation4], 0
    %s21 = scalar_lea.sflag [#allocation4], 1
    %22 = vsyncpa %s21, 0
    %23 = vsyncpa [#allocation12], 0
    %s24 = scalar_lea.sflag [#allocation12], 1
    %25 = vsyncpa %s24, 0
    loop: start=0, step=1, limit=4
    $region2: #{tpu_custom_call.1} parent=1 // loop_pre_header
      _
    $region3: #{tpu_custom_call.1} parent=1 // loop_header
      %s27 = sphi 0, %s31
      %p28 = scmp.ge.s32.totalorder %s27, 4
      %s34 = sphi 0, %s53
      %s35 = sphi 0, %s49
      %s36 = sphi 0, %s45
      %s37 = sphi 0, %s34
      %s38 = sphi 0, %s35
      %s39 = sphi 0, %s36
      %s40 = sphi 0, %s37
      %s41 = sphi 0, %s38
      %s42 = sphi 0, %s39
      %s60 = sphi 0, %s62
      %s63 = sphi 0, %s60
      %s64 = sphi 0, %s63
      %s80 = sphi 0, %s64
      %s88 = sphi 0, %s90
      %s91 = sphi 0, %s88
      %s92 = sphi 0, %s91
      %s108 = sphi 0, %s92
      %s116 = sphi 0, %s118
      %s119 = sphi 0, %s116
      %s120 = sphi 0, %s119
      %s136 = sphi 0, %s120
      %s142 = sphi 0, %s144
      %s145 = sphi 0, %s142
      %s146 = sphi 0, %s145
      %s162 = sphi 0, %s146
      %s166 = sphi 0, %s166
      %s168 = sphi 0, %s166
      %s169 = sphi 0, %s168
      %s183 = sphi 0, %s169
      %s187 = sphi 0, %s187
      %s189 = sphi 0, %s187
      %s190 = sphi 0, %s189
      %s204 = sphi 0, %s190
      %s212 = sphi 0, %s214
      %s215 = sphi 0, %s212
      %s216 = sphi 0, %s215
      %s232 = sphi 0, %s216
      %s242 = sphi 0, %s244
      %s245 = sphi 0, %s242
      %s246 = sphi 0, %s245
      %s262 = sphi 0, %s246
    $region4: #{tpu_custom_call.1} parent=1 // loop_header_branch
      %30 = sbr.rel (%p28) target = $region8
    $region5: #{tpu_custom_call.1} parent=1 // loop_body
      %s32 = ssub.s32 %s27, 1
      %s33 = ssub.s32 %s27, 2
      %s43 = sadd.s32 1, %s36
      %p44 = scmp.ge.s32.totalorder %s43, 1
      %s45 = scalar_select %p44, 0, %s43
      %s46 = sadd.s32 1, %s35
      %s47 = scalar_select %p44, %s46, %s35
      %p48 = scmp.ge.s32.totalorder %s47, 1
      %s49 = scalar_select %p48, 0, %s47
      %s50 = sadd.s32 1, %s34
      %s51 = scalar_select %p48, %s50, %s34
      %p52 = scmp.ge.s32.totalorder %s51, 2
      %s53 = scalar_select %p52, 0, %s51
      %s54 = ssub.s32 %s34, %s53
      %s55 = ssub.s32 %s36, %s45
      %s56 = sor.u32 %s54, %s55
      %s57 = ssub.s32 %s35, %s49
      %s58 = sor.u32 %s56, %s57
      %p59 = scmp.eq.s32.totalorder %s58, 0
      %s61 = sadd.s32 %s60, 1
      %s62 = scalar_select %p59, %s60, %s61
      %p65 = pneg %p59
      %p66 = scmp.eq.s32.totalorder %s27, 1
      %p67 = por %p65, %p66
      %p68 = scmp.ne.s32.totalorder %s60, %s63
      %p69 = scmp.eq.s32.totalorder %s27, 0
      %p70 = por %p68, %p69
      %p71 = scmp.ne.s32.totalorder %s60, %s63
      %p72 = scmp.eq.s32.totalorder %s32, 1
      %p73 = por %p71, %p72
      %p74 = scmp.ne.s32.totalorder %s63, %s64
      %p75 = scmp.eq.s32.totalorder %s32, 0
      %p76 = por %p74, %p75
      %p77 = scmp.ne.s32.totalorder %s63, %s64
      %p78 = scmp.eq.s32.totalorder %s33, 1
      %p79 = por %p77, %p78
      %p81 = scmp.ne.s32.totalorder %s64, %s80
      %p82 = scmp.eq.s32.totalorder %s33, 0
      %p83 = por %p81, %p82
      %s84 = ssub.s32 %s34, %s53
      %s85 = ssub.s32 %s36, %s45
      %s86 = sor.u32 %s84, %s85
      %p87 = scmp.eq.s32.totalorder %s86, 0
      %s89 = sadd.s32 %s88, 1
      %s90 = scalar_select %p87, %s88, %s89
      %p93 = pneg %p87
      %p94 = scmp.eq.s32.totalorder %s27, 1
      %p95 = por %p93, %p94
      %p96 = scmp.ne.s32.totalorder %s88, %s91
      %p97 = scmp.eq.s32.totalorder %s27, 0
      %p98 = por %p96, %p97
      %p99 = scmp.ne.s32.totalorder %s88, %s91
      %p100 = scmp.eq.s32.totalorder %s32, 1
      %p101 = por %p99, %p100
      %p102 = scmp.ne.s32.totalorder %s91, %s92
      %p103 = scmp.eq.s32.totalorder %s32, 0
      %p104 = por %p102, %p103
      %p105 = scmp.ne.s32.totalorder %s91, %s92
      %p106 = scmp.eq.s32.totalorder %s33, 1
      %p107 = por %p105, %p106
      %p109 = scmp.ne.s32.totalorder %s92, %s108
      %p110 = scmp.eq.s32.totalorder %s33, 0
      %p111 = por %p109, %p110
      %s112 = ssub.s32 %s34, %s53
      %s113 = ssub.s32 %s36, %s45
      %s114 = sor.u32 %s112, %s113
      %p115 = scmp.eq.s32.totalorder %s114, 0
      %s117 = sadd.s32 %s116, 1
      %s118 = scalar_select %p115, %s116, %s117
      %p121 = pneg %p115
      %p122 = scmp.eq.s32.totalorder %s27, 1
      %p123 = por %p121, %p122
      %p124 = scmp.ne.s32.totalorder %s116, %s119
      %p125 = scmp.eq.s32.totalorder %s27, 0
      %p126 = por %p124, %p125
      %p127 = scmp.ne.s32.totalorder %s116, %s119
      %p128 = scmp.eq.s32.totalorder %s32, 1
      %p129 = por %p127, %p128
      %p130 = scmp.ne.s32.totalorder %s119, %s120
      %p131 = scmp.eq.s32.totalorder %s32, 0
      %p132 = por %p130, %p131
      %p133 = scmp.ne.s32.totalorder %s119, %s120
      %p134 = scmp.eq.s32.totalorder %s33, 1
      %p135 = por %p133, %p134
      %p137 = scmp.ne.s32.totalorder %s120, %s136
      %p138 = scmp.eq.s32.totalorder %s33, 0
      %p139 = por %p137, %p138
      %s140 = ssub.s32 %s34, %s53
      %p141 = scmp.eq.s32.totalorder %s140, 0
      %s143 = sadd.s32 %s142, 1
      %s144 = scalar_select %p141, %s142, %s143
      %p147 = pneg %p141
      %p148 = scmp.eq.s32.totalorder %s27, 1
      %p149 = por %p147, %p148
      %p150 = scmp.ne.s32.totalorder %s142, %s145
      %p151 = scmp.eq.s32.totalorder %s27, 0
      %p152 = por %p150, %p151
      %p153 = scmp.ne.s32.totalorder %s142, %s145
      %p154 = scmp.eq.s32.totalorder %s32, 1
      %p155 = por %p153, %p154
      %p156 = scmp.ne.s32.totalorder %s145, %s146
      %p157 = scmp.eq.s32.totalorder %s32, 0
      %p158 = por %p156, %p157
      %p159 = scmp.ne.s32.totalorder %s145, %s146
      %p160 = scmp.eq.s32.totalorder %s33, 1
      %p161 = por %p159, %p160
      %p163 = scmp.ne.s32.totalorder %s146, %s162
      %p164 = scmp.eq.s32.totalorder %s33, 0
      %p165 = por %p163, %p164
      %s167 = sadd.s32 %s166, 1
      %p170 = scmp.eq.s32.totalorder %s27, 1
      %p171 = scmp.ne.s32.totalorder %s166, %s168
      %p172 = scmp.eq.s32.totalorder %s27, 0
      %p173 = por %p171, %p172
      %p174 = scmp.ne.s32.totalorder %s166, %s168
      %p175 = scmp.eq.s32.totalorder %s32, 1
      %p176 = por %p174, %p175
      %p177 = scmp.ne.s32.totalorder %s168, %s169
      %p178 = scmp.eq.s32.totalorder %s32, 0
      %p179 = por %p177, %p178
      %p180 = scmp.ne.s32.totalorder %s168, %s169
      %p181 = scmp.eq.s32.totalorder %s33, 1
      %p182 = por %p180, %p181
      %p184 = scmp.ne.s32.totalorder %s169, %s183
      %p185 = scmp.eq.s32.totalorder %s33, 0
      %p186 = por %p184, %p185
      %s188 = sadd.s32 %s187, 1
      %p191 = scmp.eq.s32.totalorder %s27, 1
      %p192 = scmp.ne.s32.totalorder %s187, %s189
      %p193 = scmp.eq.s32.totalorder %s27, 0
      %p194 = por %p192, %p193
      %p195 = scmp.ne.s32.totalorder %s187, %s189
      %p196 = scmp.eq.s32.totalorder %s32, 1
      %p197 = por %p195, %p196
      %p198 = scmp.ne.s32.totalorder %s189, %s190
      %p199 = scmp.eq.s32.totalorder %s32, 0
      %p200 = por %p198, %p199
      %p201 = scmp.ne.s32.totalorder %s189, %s190
      %p202 = scmp.eq.s32.totalorder %s33, 1
      %p203 = por %p201, %p202
      %p205 = scmp.ne.s32.totalorder %s190, %s204
      %p206 = scmp.eq.s32.totalorder %s33, 0
      %p207 = por %p205, %p206
      %s208 = ssub.s32 %s34, %s53
      %s209 = ssub.s32 %s35, %s49
      %s210 = sor.u32 %s208, %s209
      %p211 = scmp.eq.s32.totalorder %s210, 0
      %s213 = sadd.s32 %s212, 1
      %s214 = scalar_select %p211, %s212, %s213
      %p217 = pneg %p211
      %p218 = scmp.eq.s32.totalorder %s27, 1
      %p219 = por %p217, %p218
      %p220 = scmp.ne.s32.totalorder %s212, %s215
      %p221 = scmp.eq.s32.totalorder %s27, 0
      %p222 = por %p220, %p221
      %p223 = scmp.ne.s32.totalorder %s212, %s215
      %p224 = scmp.eq.s32.totalorder %s32, 1
      %p225 = por %p223, %p224
      %p226 = scmp.ne.s32.totalorder %s215, %s216
      %p227 = scmp.eq.s32.totalorder %s32, 0
      %p228 = por %p226, %p227
      %p229 = scmp.ne.s32.totalorder %s215, %s216
      %p230 = scmp.eq.s32.totalorder %s33, 1
      %p231 = por %p229, %p230
      %p233 = scmp.ne.s32.totalorder %s216, %s232
      %p234 = scmp.eq.s32.totalorder %s33, 0
      %p235 = por %p233, %p234
      %s236 = ssub.s32 %s34, %s53
      %s237 = ssub.s32 %s36, %s45
      %s238 = sor.u32 %s236, %s237
      %s239 = ssub.s32 %s35, %s49
      %s240 = sor.u32 %s238, %s239
      %p241 = scmp.eq.s32.totalorder %s240, 0
      %s243 = sadd.s32 %s242, 1
      %s244 = scalar_select %p241, %s242, %s243
      %p247 = pneg %p241
      %p248 = scmp.eq.s32.totalorder %s27, 1
      %p249 = por %p247, %p248
      %p250 = scmp.ne.s32.totalorder %s242, %s245
      %p251 = scmp.eq.s32.totalorder %s27, 0
      %p252 = por %p250, %p251
      %p253 = scmp.ne.s32.totalorder %s242, %s245
      %p254 = scmp.eq.s32.totalorder %s32, 1
      %p255 = por %p253, %p254
      %p256 = scmp.ne.s32.totalorder %s245, %s246
      %p257 = scmp.eq.s32.totalorder %s32, 0
      %p258 = por %p256, %p257
      %p259 = scmp.ne.s32.totalorder %s245, %s246
      %p260 = scmp.eq.s32.totalorder %s33, 1
      %p261 = por %p259, %p260
      %p263 = scmp.ne.s32.totalorder %s246, %s262
      %p264 = scmp.eq.s32.totalorder %s33, 0
      %p265 = por %p263, %p264
      %p266 = scmp.le.s32.totalorder 1, %s27
      %p267 = scmp.lt.s32.totalorder %s27, 3
      %p268 = pnand %p266, %p267
      %p269 = pneg %p268
      // Predicated region
      $region9: #{tpu_custom_call.1} parent=5 // pred_check
        _
      $region10: #{tpu_custom_call.1} parent=5 // pred_check_branch
        %271 = sbr.rel (%p268) target = $region12
      $region11: #{tpu_custom_call.1} parent=5 // pred_region
        %s272 = ssub.s32 %s27, 1
        // Predicated region
        $region13: #{tpu_custom_call.1} parent=11 // pred_check
          %p273 = pneg %p179
        $region14: #{tpu_custom_call.1} parent=11 // pred_check_branch
          %275 = sbr.rel (%p273) target = $region16
        $region15: #{tpu_custom_call.1} parent=11 // pred_region
          %s277 = ssub.s32 512, 512
          %278 = vsyncadd [#allocation9], %s277
          %s279 = sshll.u32 [#allocation8], 4
          %s280 = int_to_ptr.vmem [resolvable:$true] %s279
          %285 = dma.hbm_to_vmem [thread:$0]  %s4, 512, %s280, [#allocation9], 128, 128, 8
        $region16: #{tpu_custom_call.1} parent=11 // pred_fallthru
          _
        // Predicated region
        $region17: #{tpu_custom_call.1} parent=11 // pred_check
          %p286 = pneg %p200
        $region18: #{tpu_custom_call.1} parent=11 // pred_check_branch
          %288 = sbr.rel (%p286) target = $region20
        $region19: #{tpu_custom_call.1} parent=11 // pred_region
          _
        $region20: #{tpu_custom_call.1} parent=11 // pred_fallthru
          _
      $region12: #{tpu_custom_call.1} parent=5 // pred_fallthru
        _
      %p289 = scmp.lt.s32.totalorder %s27, 2
      // Predicated region
      $region21: #{tpu_custom_call.1} parent=5 // pred_check
        %p290 = pneg %p289
      $region22: #{tpu_custom_call.1} parent=5 // pred_check_branch
        %292 = sbr.rel (%p290) target = $region24
      $region23: #{tpu_custom_call.1} parent=5 // pred_region
        // Predicated region
        $region25: #{tpu_custom_call.1} parent=23 // pred_check
          %p293 = pneg %p70
        $region26: #{tpu_custom_call.1} parent=23 // pred_check_branch
          %295 = sbr.rel (%p293) target = $region28
        $region27: #{tpu_custom_call.1} parent=23 // pred_region
          %s296 = sand.u32 %s60, 1
          %s297 = scalar_lea.sflag [#allocation3], %s296
          %s298 = sand.u32 %s60, 1
          %s299 = smul.addr %s298, 32
          %s300 = scalar_lea.vmem [#allocation2], %s299
          %s301 = smul.u32 4, %s36
          %s303 = ssub.s32 512, 512
          %304 = vsyncadd %s297, %s303
          %s305 = sadd.s32 %s35, %s301
          %s306 = smul.addr %s34, 4
          %s307 = sadd.s32 %s305, %s306
          %s308 = smul.addr %s307, 128
          %s309 = scalar_lea.hbm %s0, %s308
          %s310 = sshll.u32 %s300, 4
          %s311 = int_to_ptr.vmem [resolvable:$true] %s310
          %316 = dma.hbm_to_vmem [thread:$0]  %s309, 512, %s311, %s297, 128, 128, 8
        $region28: #{tpu_custom_call.1} parent=23 // pred_fallthru
          _
        // Predicated region
        $region29: #{tpu_custom_call.1} parent=23 // pred_check
          %p317 = pneg %p98
        $region30: #{tpu_custom_call.1} parent=23 // pred_check_branch
          %319 = sbr.rel (%p317) target = $region32
        $region31: #{tpu_custom_call.1} parent=23 // pred_region
          %s320 = sand.u32 %s27, 1
          %s321 = scalar_lea.sflag [#allocation6], %s320
          %s322 = sand.u32 %s88, 1
          %s323 = smul.addr %s322, 32
          %s324 = scalar_lea.vmem [#allocation5], %s323
          %s325 = smul.u32 4, %s36
          %s327 = ssub.s32 512, 512
          %328 = vsyncadd %s321, %s327
          %s329 = smul.addr %s34, 4
          %s330 = sadd.s32 %s325, %s329
          %s331 = smul.addr %s330, 128
          %s332 = scalar_lea.hbm %s1, %s331
          %s333 = sshll.u32 %s324, 4
          %s334 = int_to_ptr.vmem [resolvable:$true] %s333
          %339 = dma.hbm_to_vmem [thread:$0]  %s332, 512, %s334, %s321, 128, 128, 8
        $region32: #{tpu_custom_call.1} parent=23 // pred_fallthru
          _
        // Predicated region
        $region33: #{tpu_custom_call.1} parent=23 // pred_check
          %p340 = pneg %p126
        $region34: #{tpu_custom_call.1} parent=23 // pred_check_branch
          %342 = sbr.rel (%p340) target = $region36
        $region35: #{tpu_custom_call.1} parent=23 // pred_region
          %s343 = sand.u32 %s27, 1
          %s344 = scalar_lea.sflag [#allocation6], %s343
          %s345 = sand.u32 %s116, 1
          %s346 = smul.addr %s345, 32
          %s347 = scalar_lea.vmem [#allocation7], %s346
          %s348 = smul.u32 4, %s36
          %s350 = ssub.s32 512, 512
          %351 = vsyncadd %s344, %s350
          %s352 = smul.addr %s34, 4
          %s353 = sadd.s32 %s348, %s352
          %s354 = smul.addr %s353, 128
          %s355 = scalar_lea.hbm %s2, %s354
          %s356 = sshll.u32 %s347, 4
          %s357 = int_to_ptr.vmem [resolvable:$true] %s356
          %362 = dma.hbm_to_vmem [thread:$0]  %s355, 512, %s357, %s344, 128, 128, 8
        $region36: #{tpu_custom_call.1} parent=23 // pred_fallthru
          _
        // Predicated region
        $region37: #{tpu_custom_call.1} parent=23 // pred_check
          %p363 = pneg %p152
        $region38: #{tpu_custom_call.1} parent=23 // pred_check_branch
          %365 = sbr.rel (%p363) target = $region40
        $region39: #{tpu_custom_call.1} parent=23 // pred_region
          %p366 = scmp.lt.s32.totalorder %s34, 1
          %s367 = scalar_select %p366, %s34, 1
          %s368 = scalar_lea.vmem %s3, %s367
        $region40: #{tpu_custom_call.1} parent=23 // pred_fallthru
          _
      $region24: #{tpu_custom_call.1} parent=5 // pred_fallthru
        _
      %p369 = scmp.le.s32.totalorder 1, %s27
      %p370 = scmp.lt.s32.totalorder %s27, 3
      %p371 = pnand %p369, %p370
      %p372 = pneg %p371
      // Predicated region
      $region41: #{tpu_custom_call.1} parent=5 // pred_check
        _
      $region42: #{tpu_custom_call.1} parent=5 // pred_check_branch
        %374 = sbr.rel (%p371) target = $region44
      $region43: #{tpu_custom_call.1} parent=5 // pred_region
        %s375 = ssub.s32 %s27, 1
        %s376 = sand.u32 %s63, 1
        %s377 = scalar_lea.sflag [#allocation3], %s376
        %s378 = sand.u32 %s63, 1
        %s379 = smul.addr %s378, 32
        %s380 = scalar_lea.vmem [#allocation2], %s379
        // Predicated region
        $region45: #{tpu_custom_call.1} parent=43 // pred_check
          %p381 = pneg %p76
        $region46: #{tpu_custom_call.1} parent=43 // pred_check_branch
          %383 = sbr.rel (%p381) target = $region48
        $region47: #{tpu_custom_call.1} parent=43 // pred_region
          %384 = dma.done %s377, 512
        $region48: #{tpu_custom_call.1} parent=43 // pred_fallthru
          _
        %s385 = sand.u32 %s32, 1
        %s386 = scalar_lea.sflag [#allocation6], %s385
        %s387 = sand.u32 %s91, 1
        %s388 = smul.addr %s387, 32
        %s389 = scalar_lea.vmem [#allocation5], %s388
        // Predicated region
        $region49: #{tpu_custom_call.1} parent=43 // pred_check
          %p390 = pneg %p104
        $region50: #{tpu_custom_call.1} parent=43 // pred_check_branch
          %392 = sbr.rel (%p390) target = $region52
        $region51: #{tpu_custom_call.1} parent=43 // pred_region
          %393 = dma.done %s386, 512
        $region52: #{tpu_custom_call.1} parent=43 // pred_fallthru
          _
        %s394 = sand.u32 %s32, 1
        %s395 = scalar_lea.sflag [#allocation6], %s394
        %s396 = sand.u32 %s119, 1
        %s397 = smul.addr %s396, 32
        %s398 = scalar_lea.vmem [#allocation7], %s397
        // Predicated region
        $region53: #{tpu_custom_call.1} parent=43 // pred_check
          %p399 = pneg %p132
        $region54: #{tpu_custom_call.1} parent=43 // pred_check_branch
          %401 = sbr.rel (%p399) target = $region56
        $region55: #{tpu_custom_call.1} parent=43 // pred_region
          %402 = dma.done %s395, 512
        $region56: #{tpu_custom_call.1} parent=43 // pred_fallthru
          _
        // Predicated region
        $region57: #{tpu_custom_call.1} parent=43 // pred_check
          %p403 = pneg %p179
        $region58: #{tpu_custom_call.1} parent=43 // pred_check_branch
          %405 = sbr.rel (%p403) target = $region60
        $region59: #{tpu_custom_call.1} parent=43 // pred_region
          %406 = dma.done [#allocation9], 512
        $region60: #{tpu_custom_call.1} parent=43 // pred_fallthru
          _
        %s407 = sand.u32 %s63, 1
        %s408 = scalar_lea.sflag [#allocation3], %s407
        %s409 = sand.u32 %s63, 1
        %s410 = smul.addr %s409, 32
        %s411 = scalar_lea.vmem [#allocation2], %s410
        %p412 = pneg %p76
        %p413 = pneg %p73
        %s414 = sand.u32 %s32, 1
        %s415 = scalar_lea.sflag [#allocation6], %s414
        %s416 = sand.u32 %s91, 1
        %s417 = smul.addr %s416, 32
        %s418 = scalar_lea.vmem [#allocation5], %s417
        %p419 = pneg %p104
        %p420 = pneg %p101
        %s421 = sand.u32 %s32, 1
        %s422 = scalar_lea.sflag [#allocation6], %s421
        %s423 = sand.u32 %s119, 1
        %s424 = smul.addr %s423, 32
        %s425 = scalar_lea.vmem [#allocation7], %s424
        %p426 = pneg %p132
        %p427 = pneg %p129
        %p428 = scmp.lt.s32.totalorder %s37, 1
        %s429 = scalar_select %p428, %s37, 1
        %s430 = scalar_lea.vmem %s3, %s429
        %p431 = pneg %p158
        %p432 = pneg %p155
        %p433 = pneg %p179
        %p434 = pneg %p176
        %p435 = pneg %p200
        %p436 = pneg %p197
        %p437 = pneg %p228
        %p438 = pneg %p225
        %s439 = sand.u32 %s215, 1
        %s440 = scalar_lea.sflag [#allocation4], %s439
        %s441 = sand.u32 %s215, 1
        %s442 = smul.addr %s441, 8
        %s443 = scalar_lea.vmem [#allocation10], %s442
        %p444 = pneg %p258
        %p445 = pneg %p255
        %s446 = sand.u32 %s245, 1
        %s447 = scalar_lea.sflag [#allocation12], %s446
        %s448 = sand.u32 %s245, 1
        %s449 = smul.addr %s448, 32
        %s450 = scalar_lea.vmem [#allocation11], %s449
        %s451 = smul.u32 4, %s39
        %s452 = smul.u32 4, %s39
        %s453 = smul.u32 4, %s39
        %p454 = scmp.lt.s32.totalorder %s37, 1
        %s455 = scalar_select %p454, %s37, 1
        %s456 = scalar_lea.vmem %s3, %s455
        %s457 = smul.u32 4, %s39
        %v458 = vld [vmem:[%s380] sm:$0xff]
        %v459 = vld [vmem:[%s380 + $0x8] sm:$0xff]
        %v460 = vld [vmem:[%s380 + $0x10] sm:$0xff]
        %v461 = vld [vmem:[%s380 + $0x18] sm:$0xff]
        %v462 = vld [vmem:[%s389] sm:$0xff]
        %v463 = vld [vmem:[%s389 + $0x8] sm:$0xff]
        %v464 = vld [vmem:[%s389 + $0x10] sm:$0xff]
        %v465 = vld [vmem:[%s389 + $0x18] sm:$0xff]
        %v466 = vld [vmem:[%s398] sm:$0xff]
        %v467 = vld [vmem:[%s398 + $0x8] sm:$0xff]
        %v468 = vld [vmem:[%s398 + $0x10] sm:$0xff]
        %v469 = vld [vmem:[%s398 + $0x18] sm:$0xff]
        %v470 = vld [vmem:[%s456] sm:$0x1]
        %v472 = vlaneseq
        %v473 = vshrl.u32 %v472, 7
        %v474 = vsub.s32 0, %v473
        %v475 = vrot.slane %v470, %v474
        %vm477 = vcmask 64512
        %v479 = vsel %vm477, %v458, 0
        %v482 = vsel %vm477, %v462, 0
        %484 = vmatprep.subr.mxu0 0.0
        %485 = vmatpush1.xpose.msra.mxu0 0.0
        %486 = vmatprep.subr.mxu0 0.0
        %487 = vmatpush1.xpose.msra.mxu0 0.0
        %488 = vmatprep.subr.mxu0 0.0
        %489 = vmatpush1.xpose.msra.mxu0 0.0
        %490 = vmatprep.subr.mxu0 0.0
        %491 = vmatpush1.xpose.msra.mxu0 0.0
        %492 = vmatprep.subr.mxu0 0.0
        %493 = vmatpush1.xpose.msra.mxu0 0.0
        %494 = vmatprep.subr.mxu0 0.0
        %495 = vmatpush1.xpose.msra.mxu0 0.0
        %496 = vmatprep.subr.mxu0 0.0
        %497 = vmatpush1.xpose.msra.mxu0 0.0
        %498 = vmatprep.subr.mxu0 0.0
        %499 = vmatpush1.xpose.msra.mxu0 0.0
        %500 = vmatprep.subr.mxu0 0.0
        %501 = vmatpush1.xpose.msra.mxu0 0.0
        %502 = vmatprep.subr.mxu0 0.0
        %503 = vmatpush1.xpose.msra.mxu0 0.0
        %504 = vmatprep.subr.mxu0 0.0
        %505 = vmatpush1.xpose.msra.mxu0 0.0
        %506 = vmatprep.subr.mxu0 0.0
        %507 = vmatpush1.xpose.msra.mxu0 0.0
        %508 = vmatprep.subr.mxu0 0.0
        %509 = vmatpush1.xpose.msra.mxu0 0.0
        %510 = vmatprep.subr.mxu0 0.0
        %511 = vmatpush1.xpose.msra.mxu0 0.0
        %512 = vmatprep.subr.mxu0 0.0
        %513 = vmatpush1.xpose.msra.mxu0 0.0
        %514 = vmatprep.subr.mxu0 0.0
        %515 = vmatpush1.xpose.msra.mxu0 %v482
        %516 = vmatprep.subr.mxu0 0.0
        %517 = vmatpush2.xpose.msra.mxu0 0.0
        %518 = vmatprep.subr.mxu0 0.0
        %519 = vmatpush2.xpose.msra.mxu0 0.0
        %520 = vmatprep.subr.mxu0 0.0
        %521 = vmatpush2.xpose.msra.mxu0 0.0
        %522 = vmatprep.subr.mxu0 0.0
        %523 = vmatpush2.xpose.msra.mxu0 0.0
        %524 = vmatprep.subr.mxu0 0.0
        %525 = vmatpush2.xpose.msra.mxu0 0.0
        %526 = vmatprep.subr.mxu0 0.0
        %527 = vmatpush2.xpose.msra.mxu0 0.0
        %528 = vmatprep.subr.mxu0 0.0
        %529 = vmatpush2.xpose.msra.mxu0 0.0
        %530 = vmatprep.subr.mxu0 0.0
        %531 = vmatpush2.xpose.msra.mxu0 0.0
        %532 = vmatprep.subr.mxu0 0.0
        %533 = vmatpush2.xpose.msra.mxu0 0.0
        %534 = vmatprep.subr.mxu0 0.0
        %535 = vmatpush2.xpose.msra.mxu0 0.0
        %536 = vmatprep.subr.mxu0 0.0
        %537 = vmatpush2.xpose.msra.mxu0 0.0
        %538 = vmatprep.subr.mxu0 0.0
        %539 = vmatpush2.xpose.msra.mxu0 0.0
        %540 = vmatprep.subr.mxu0 0.0
        %541 = vmatpush2.xpose.msra.mxu0 0.0
        %542 = vmatprep.subr.mxu0 0.0
        %543 = vmatpush2.xpose.msra.mxu0 0.0
        %544 = vmatprep.subr.mxu0 0.0
        %545 = vmatpush2.xpose.msra.mxu0 0.0
        %546 = vmatprep.subr.mxu0 0.0
        %547 = vmatpush2.xpose.msra.mxu0 0.0
        %548 = vmatprep.mubr.f32.mxu0 0.0
        %549 = vmatmul.mubr.f32.gmra.mxu0 %v479
        %v550 = vpop.f32.mrf.mxu0
        %v551 = vadd.f32 %v475, %v550
        %v552 = vpop.f32.mrf.mxu0
        %553 = vdwg.mxu0
        %v555 = vsel %vm477, %v459, 0
        %v558 = vsel %vm477, %v463, 0
        %560 = vmatprep.subr.mxu0 0.0
        %561 = vmatpush1.xpose.msra.mxu0 0.0
        %562 = vmatprep.subr.mxu0 0.0
        %563 = vmatpush1.xpose.msra.mxu0 0.0
        %564 = vmatprep.subr.mxu0 0.0
        %565 = vmatpush1.xpose.msra.mxu0 0.0
        %566 = vmatprep.subr.mxu0 0.0
        %567 = vmatpush1.xpose.msra.mxu0 0.0
        %568 = vmatprep.subr.mxu0 0.0
        %569 = vmatpush1.xpose.msra.mxu0 0.0
        %570 = vmatprep.subr.mxu0 0.0
        %571 = vmatpush1.xpose.msra.mxu0 0.0
        %572 = vmatprep.subr.mxu0 0.0
        %573 = vmatpush1.xpose.msra.mxu0 0.0
        %574 = vmatprep.subr.mxu0 0.0
        %575 = vmatpush1.xpose.msra.mxu0 0.0
        %576 = vmatprep.subr.mxu0 0.0
        %577 = vmatpush1.xpose.msra.mxu0 0.0
        %578 = vmatprep.subr.mxu0 0.0
        %579 = vmatpush1.xpose.msra.mxu0 0.0
        %580 = vmatprep.subr.mxu0 0.0
        %581 = vmatpush1.xpose.msra.mxu0 0.0
        %582 = vmatprep.subr.mxu0 0.0
        %583 = vmatpush1.xpose.msra.mxu0 0.0
        %584 = vmatprep.subr.mxu0 0.0
        %585 = vmatpush1.xpose.msra.mxu0 0.0
        %586 = vmatprep.subr.mxu0 0.0
        %587 = vmatpush1.xpose.msra.mxu0 0.0
        %588 = vmatprep.subr.mxu0 0.0
        %589 = vmatpush1.xpose.msra.mxu0 0.0
        %590 = vmatprep.subr.mxu0 0.0
        %591 = vmatpush1.xpose.msra.mxu0 %v558
        %592 = vmatprep.subr.mxu0 0.0
        %593 = vmatpush2.xpose.msra.mxu0 0.0
        %594 = vmatprep.subr.mxu0 0.0
        %595 = vmatpush2.xpose.msra.mxu0 0.0
        %596 = vmatprep.subr.mxu0 0.0
        %597 = vmatpush2.xpose.msra.mxu0 0.0
        %598 = vmatprep.subr.mxu0 0.0
        %599 = vmatpush2.xpose.msra.mxu0 0.0
        %600 = vmatprep.subr.mxu0 0.0
        %601 = vmatpush2.xpose.msra.mxu0 0.0
        %602 = vmatprep.subr.mxu0 0.0
        %603 = vmatpush2.xpose.msra.mxu0 0.0
        %604 = vmatprep.subr.mxu0 0.0
        %605 = vmatpush2.xpose.msra.mxu0 0.0
        %606 = vmatprep.subr.mxu0 0.0
        %607 = vmatpush2.xpose.msra.mxu0 0.0
        %608 = vmatprep.subr.mxu0 0.0
        %609 = vmatpush2.xpose.msra.mxu0 0.0
        %610 = vmatprep.subr.mxu0 0.0
        %611 = vmatpush2.xpose.msra.mxu0 0.0
        %612 = vmatprep.subr.mxu0 0.0
        %613 = vmatpush2.xpose.msra.mxu0 0.0
        %614 = vmatprep.subr.mxu0 0.0
        %615 = vmatpush2.xpose.msra.mxu0 0.0
        %616 = vmatprep.subr.mxu0 0.0
        %617 = vmatpush2.xpose.msra.mxu0 0.0
        %618 = vmatprep.subr.mxu0 0.0
        %619 = vmatpush2.xpose.msra.mxu0 0.0
        %620 = vmatprep.subr.mxu0 0.0
        %621 = vmatpush2.xpose.msra.mxu0 0.0
        %622 = vmatprep.subr.mxu0 0.0
        %623 = vmatpush2.xpose.msra.mxu0 0.0
        %624 = vmatprep.mubr.f32.mxu0 0.0
        %625 = vmatmul.mubr.f32.gmra.mxu0 %v555
        %v626 = vpop.f32.mrf.mxu0
        %v627 = vadd.f32 %v475, %v626
        %v628 = vpop.f32.mrf.mxu0
        %629 = vdwg.mxu0
        %v631 = vsel %vm477, %v460, 0
        %v634 = vsel %vm477, %v464, 0
        %636 = vmatprep.subr.mxu0 0.0
        %637 = vmatpush1.xpose.msra.mxu0 0.0
        %638 = vmatprep.subr.mxu0 0.0
        %639 = vmatpush1.xpose.msra.mxu0 0.0
        %640 = vmatprep.subr.mxu0 0.0
        %641 = vmatpush1.xpose.msra.mxu0 0.0
        %642 = vmatprep.subr.mxu0 0.0
        %643 = vmatpush1.xpose.msra.mxu0 0.0
        %644 = vmatprep.subr.mxu0 0.0
        %645 = vmatpush1.xpose.msra.mxu0 0.0
        %646 = vmatprep.subr.mxu0 0.0
        %647 = vmatpush1.xpose.msra.mxu0 0.0
        %648 = vmatprep.subr.mxu0 0.0
        %649 = vmatpush1.xpose.msra.mxu0 0.0
        %650 = vmatprep.subr.mxu0 0.0
        %651 = vmatpush1.xpose.msra.mxu0 0.0
        %652 = vmatprep.subr.mxu0 0.0
        %653 = vmatpush1.xpose.msra.mxu0 0.0
        %654 = vmatprep.subr.mxu0 0.0
        %655 = vmatpush1.xpose.msra.mxu0 0.0
        %656 = vmatprep.subr.mxu0 0.0
        %657 = vmatpush1.xpose.msra.mxu0 0.0
        %658 = vmatprep.subr.mxu0 0.0
        %659 = vmatpush1.xpose.msra.mxu0 0.0
        %660 = vmatprep.subr.mxu0 0.0
        %661 = vmatpush1.xpose.msra.mxu0 0.0
        %662 = vmatprep.subr.mxu0 0.0
        %663 = vmatpush1.xpose.msra.mxu0 0.0
        %664 = vmatprep.subr.mxu0 0.0
        %665 = vmatpush1.xpose.msra.mxu0 0.0
        %666 = vmatprep.subr.mxu0 0.0
        %667 = vmatpush1.xpose.msra.mxu0 %v634
        %668 = vmatprep.subr.mxu0 0.0
        %669 = vmatpush2.xpose.msra.mxu0 0.0
        %670 = vmatprep.subr.mxu0 0.0
        %671 = vmatpush2.xpose.msra.mxu0 0.0
        %672 = vmatprep.subr.mxu0 0.0
        %673 = vmatpush2.xpose.msra.mxu0 0.0
        %674 = vmatprep.subr.mxu0 0.0
        %675 = vmatpush2.xpose.msra.mxu0 0.0
        %676 = vmatprep.subr.mxu0 0.0
        %677 = vmatpush2.xpose.msra.mxu0 0.0
        %678 = vmatprep.subr.mxu0 0.0
        %679 = vmatpush2.xpose.msra.mxu0 0.0
        %680 = vmatprep.subr.mxu0 0.0
        %681 = vmatpush2.xpose.msra.mxu0 0.0
        %682 = vmatprep.subr.mxu0 0.0
        %683 = vmatpush2.xpose.msra.mxu0 0.0
        %684 = vmatprep.subr.mxu0 0.0
        %685 = vmatpush2.xpose.msra.mxu0 0.0
        %686 = vmatprep.subr.mxu0 0.0
        %687 = vmatpush2.xpose.msra.mxu0 0.0
        %688 = vmatprep.subr.mxu0 0.0
        %689 = vmatpush2.xpose.msra.mxu0 0.0
        %690 = vmatprep.subr.mxu0 0.0
        %691 = vmatpush2.xpose.msra.mxu0 0.0
        %692 = vmatprep.subr.mxu0 0.0
        %693 = vmatpush2.xpose.msra.mxu0 0.0
        %694 = vmatprep.subr.mxu0 0.0
        %695 = vmatpush2.xpose.msra.mxu0 0.0
        %696 = vmatprep.subr.mxu0 0.0
        %697 = vmatpush2.xpose.msra.mxu0 0.0
        %698 = vmatprep.subr.mxu0 0.0
        %699 = vmatpush2.xpose.msra.mxu0 0.0
        %700 = vmatprep.mubr.f32.mxu0 0.0
        %701 = vmatmul.mubr.f32.gmra.mxu0 %v631
        %v702 = vpop.f32.mrf.mxu0
        %v703 = vadd.f32 %v475, %v702
        %v704 = vpop.f32.mrf.mxu0
        %705 = vdwg.mxu0
        %v707 = vsel %vm477, %v461, 0
        %v710 = vsel %vm477, %v465, 0
        %712 = vmatprep.subr.mxu0 0.0
        %713 = vmatpush1.xpose.msra.mxu0 0.0
        %714 = vmatprep.subr.mxu0 0.0
        %715 = vmatpush1.xpose.msra.mxu0 0.0
        %716 = vmatprep.subr.mxu0 0.0
        %717 = vmatpush1.xpose.msra.mxu0 0.0
        %718 = vmatprep.subr.mxu0 0.0
        %719 = vmatpush1.xpose.msra.mxu0 0.0
        %720 = vmatprep.subr.mxu0 0.0
        %721 = vmatpush1.xpose.msra.mxu0 0.0
        %722 = vmatprep.subr.mxu0 0.0
        %723 = vmatpush1.xpose.msra.mxu0 0.0
        %724 = vmatprep.subr.mxu0 0.0
        %725 = vmatpush1.xpose.msra.mxu0 0.0
        %726 = vmatprep.subr.mxu0 0.0
        %727 = vmatpush1.xpose.msra.mxu0 0.0
        %728 = vmatprep.subr.mxu0 0.0
        %729 = vmatpush1.xpose.msra.mxu0 0.0
        %730 = vmatprep.subr.mxu0 0.0
        %731 = vmatpush1.xpose.msra.mxu0 0.0
        %732 = vmatprep.subr.mxu0 0.0
        %733 = vmatpush1.xpose.msra.mxu0 0.0
        %734 = vmatprep.subr.mxu0 0.0
        %735 = vmatpush1.xpose.msra.mxu0 0.0
        %736 = vmatprep.subr.mxu0 0.0
        %737 = vmatpush1.xpose.msra.mxu0 0.0
        %738 = vmatprep.subr.mxu0 0.0
        %739 = vmatpush1.xpose.msra.mxu0 0.0
        %740 = vmatprep.subr.mxu0 0.0
        %741 = vmatpush1.xpose.msra.mxu0 0.0
        %742 = vmatprep.subr.mxu0 0.0
        %743 = vmatpush1.xpose.msra.mxu0 %v710
        %744 = vmatprep.subr.mxu0 0.0
        %745 = vmatpush2.xpose.msra.mxu0 0.0
        %746 = vmatprep.subr.mxu0 0.0
        %747 = vmatpush2.xpose.msra.mxu0 0.0
        %748 = vmatprep.subr.mxu0 0.0
        %749 = vmatpush2.xpose.msra.mxu0 0.0
        %750 = vmatprep.subr.mxu0 0.0
        %751 = vmatpush2.xpose.msra.mxu0 0.0
        %752 = vmatprep.subr.mxu0 0.0
        %753 = vmatpush2.xpose.msra.mxu0 0.0
        %754 = vmatprep.subr.mxu0 0.0
        %755 = vmatpush2.xpose.msra.mxu0 0.0
        %756 = vmatprep.subr.mxu0 0.0
        %757 = vmatpush2.xpose.msra.mxu0 0.0
        %758 = vmatprep.subr.mxu0 0.0
        %759 = vmatpush2.xpose.msra.mxu0 0.0
        %760 = vmatprep.subr.mxu0 0.0
        %761 = vmatpush2.xpose.msra.mxu0 0.0
        %762 = vmatprep.subr.mxu0 0.0
        %763 = vmatpush2.xpose.msra.mxu0 0.0
        %764 = vmatprep.subr.mxu0 0.0
        %765 = vmatpush2.xpose.msra.mxu0 0.0
        %766 = vmatprep.subr.mxu0 0.0
        %767 = vmatpush2.xpose.msra.mxu0 0.0
        %768 = vmatprep.subr.mxu0 0.0
        %769 = vmatpush2.xpose.msra.mxu0 0.0
        %770 = vmatprep.subr.mxu0 0.0
        %771 = vmatpush2.xpose.msra.mxu0 0.0
        %772 = vmatprep.subr.mxu0 0.0
        %773 = vmatpush2.xpose.msra.mxu0 0.0
        %774 = vmatprep.subr.mxu0 0.0
        %775 = vmatpush2.xpose.msra.mxu0 0.0
        %776 = vmatprep.mubr.f32.mxu0 0.0
        %777 = vmatmul.mubr.f32.gmra.mxu0 %v707
        %v778 = vpop.f32.mrf.mxu0
        %v779 = vadd.f32 %v475, %v778
        %v780 = vpop.f32.mrf.mxu0
        %781 = vdwg.mxu0
        %v782 = vsel %vm477, %v551, -inf
        %783 = vmax.xlane.f32.xlu0 %v782
        %v784 = vpop.xlane.xlu0 %783
        %v785 = vsel %vm477, %v627, -inf
        %786 = vmax.xlane.f32.xlu0 %v785
        %v787 = vpop.xlane.xlu0 %786
        %v788 = vsel %vm477, %v703, -inf
        %789 = vmax.xlane.f32.xlu0 %v788
        %v790 = vpop.xlane.xlu0 %789
        %v791 = vsel %vm477, %v779, -inf
        %792 = vmax.xlane.f32.xlu0 %v791
        %v793 = vpop.xlane.xlu0 %792
        %v794 = vsub.f32 %v551, %v784
        %v795 = vsub.f32 %v627, %v787
        %v796 = vsub.f32 %v703, %v790
        %v797 = vsub.f32 %v779, %v793
        %v798 = vmul.f32 %v794, 1.442695
        %v799 = vpow.pop %v798
        %v800 = vmul.f32 %v795, 1.442695
        %v801 = vpow.pop %v800
        %v802 = vmul.f32 %v796, 1.442695
        %v803 = vpow.pop %v802
        %v804 = vmul.f32 %v797, 1.442695
        %v805 = vpow.pop %v804
        %v806 = vsel %vm477, %v799, 0.0
        %807 = vadd.xlane.f32.xlu0 %v806
        %v808 = vpop.xlane.xlu0 %807
        %v809 = vsel %vm477, %v801, 0.0
        %810 = vadd.xlane.f32.xlu0 %v809
        %v811 = vpop.xlane.xlu0 %810
        %v812 = vsel %vm477, %v803, 0.0
        %813 = vadd.xlane.f32.xlu0 %v812
        %v814 = vpop.xlane.xlu0 %813
        %v815 = vsel %vm477, %v805, 0.0
        %816 = vadd.xlane.f32.xlu0 %v815
        %v817 = vpop.xlane.xlu0 %816
        %v818 = vrcp.pop %v808
        %v819 = vrcp.pop %v811
        %v820 = vrcp.pop %v814
        %v821 = vrcp.pop %v817
        %v822 = vmul.f32 %v799, %v818
        %v823 = vmul.f32 %v801, %v819
        %v824 = vmul.f32 %v803, %v820
        %v825 = vmul.f32 %v805, %v821
        %826 = vst.msk [vmem:[%s450] sm:$0xff] %vm477, %v822
        %827 = vst.msk [vmem:[%s450 + $0x8] sm:$0xff] %vm477, %v823
        %828 = vst.msk [vmem:[%s450 + $0x10] sm:$0xff] %vm477, %v824
        %829 = vst.msk [vmem:[%s450 + $0x18] sm:$0xff] %vm477, %v825
        %v831 = vsel %vm477, %v822, 0
        %833 = vmatprep.subr.mxu0 0.0
        %834 = vmatpush1.msra.mxu0 0.0
        %835 = vmatprep.subr.mxu0 0.0
        %836 = vmatpush1.msra.mxu0 0.0
        %837 = vmatprep.subr.mxu0 0.0
        %838 = vmatpush1.msra.mxu0 0.0
        %839 = vmatprep.subr.mxu0 0.0
        %840 = vmatpush1.msra.mxu0 0.0
        %841 = vmatprep.subr.mxu0 0.0
        %842 = vmatpush1.msra.mxu0 0.0
        %843 = vmatprep.subr.mxu0 0.0
        %844 = vmatpush1.msra.mxu0 0.0
        %845 = vmatprep.subr.mxu0 0.0
        %846 = vmatpush1.msra.mxu0 0.0
        %847 = vmatprep.subr.mxu0 0.0
        %848 = vmatpush1.msra.mxu0 0.0
        %849 = vmatprep.subr.mxu0 0.0
        %850 = vmatpush1.msra.mxu0 0.0
        %851 = vmatprep.subr.mxu0 0.0
        %852 = vmatpush1.msra.mxu0 0.0
        %853 = vmatprep.subr.mxu0 0.0
        %854 = vmatpush1.msra.mxu0 0.0
        %855 = vmatprep.subr.mxu0 0.0
        %856 = vmatpush1.msra.mxu0 0.0
        %857 = vmatprep.subr.mxu0 0.0
        %858 = vmatpush1.msra.mxu0 0.0
        %859 = vmatprep.subr.mxu0 0.0
        %860 = vmatpush1.msra.mxu0 0.0
        %861 = vmatprep.subr.mxu0 0.0
        %862 = vmatpush1.msra.mxu0 0.0
        %863 = vmatprep.subr.mxu0 0.0
        %864 = vmatpush1.msra.mxu0 %v466
        %865 = vmatprep.subr.mxu0 0.0
        %866 = vmatpush2.msra.mxu0 0.0
        %867 = vmatprep.subr.mxu0 0.0
        %868 = vmatpush2.msra.mxu0 0.0
        %869 = vmatprep.subr.mxu0 0.0
        %870 = vmatpush2.msra.mxu0 0.0
        %871 = vmatprep.subr.mxu0 0.0
        %872 = vmatpush2.msra.mxu0 0.0
        %873 = vmatprep.subr.mxu0 0.0
        %874 = vmatpush2.msra.mxu0 0.0
        %875 = vmatprep.subr.mxu0 0.0
        %876 = vmatpush2.msra.mxu0 0.0
        %877 = vmatprep.subr.mxu0 0.0
        %878 = vmatpush2.msra.mxu0 0.0
        %879 = vmatprep.subr.mxu0 0.0
        %880 = vmatpush2.msra.mxu0 0.0
        %881 = vmatprep.subr.mxu0 0.0
        %882 = vmatpush2.msra.mxu0 0.0
        %883 = vmatprep.subr.mxu0 0.0
        %884 = vmatpush2.msra.mxu0 0.0
        %885 = vmatprep.subr.mxu0 0.0
        %886 = vmatpush2.msra.mxu0 0.0
        %887 = vmatprep.subr.mxu0 0.0
        %888 = vmatpush2.msra.mxu0 0.0
        %889 = vmatprep.subr.mxu0 0.0
        %890 = vmatpush2.msra.mxu0 0.0
        %891 = vmatprep.subr.mxu0 0.0
        %892 = vmatpush2.msra.mxu0 0.0
        %893 = vmatprep.subr.mxu0 0.0
        %894 = vmatpush2.msra.mxu0 0.0
        %895 = vmatprep.subr.mxu0 0.0
        %896 = vmatpush2.msra.mxu0 0.0
        %897 = vmatprep.mubr.f32.mxu0 0.0
        %898 = vmatmul.mubr.f32.gmra.mxu0 %v831
        %v899 = vpop.f32.mrf.mxu0
        %v900 = vadd.f32 0.0, %v899
        %v901 = vpop.f32.mrf.mxu0
        %902 = vdwg.mxu0
        %v904 = vsel %vm477, %v823, 0
        %906 = vmatprep.subr.mxu0 0.0
        %907 = vmatpush1.msra.mxu0 0.0
        %908 = vmatprep.subr.mxu0 0.0
        %909 = vmatpush1.msra.mxu0 0.0
        %910 = vmatprep.subr.mxu0 0.0
        %911 = vmatpush1.msra.mxu0 0.0
        %912 = vmatprep.subr.mxu0 0.0
        %913 = vmatpush1.msra.mxu0 0.0
        %914 = vmatprep.subr.mxu0 0.0
        %915 = vmatpush1.msra.mxu0 0.0
        %916 = vmatprep.subr.mxu0 0.0
        %917 = vmatpush1.msra.mxu0 0.0
        %918 = vmatprep.subr.mxu0 0.0
        %919 = vmatpush1.msra.mxu0 0.0
        %920 = vmatprep.subr.mxu0 0.0
        %921 = vmatpush1.msra.mxu0 0.0
        %922 = vmatprep.subr.mxu0 0.0
        %923 = vmatpush1.msra.mxu0 0.0
        %924 = vmatprep.subr.mxu0 0.0
        %925 = vmatpush1.msra.mxu0 0.0
        %926 = vmatprep.subr.mxu0 0.0
        %927 = vmatpush1.msra.mxu0 0.0
        %928 = vmatprep.subr.mxu0 0.0
        %929 = vmatpush1.msra.mxu0 0.0
        %930 = vmatprep.subr.mxu0 0.0
        %931 = vmatpush1.msra.mxu0 0.0
        %932 = vmatprep.subr.mxu0 0.0
        %933 = vmatpush1.msra.mxu0 0.0
        %934 = vmatprep.subr.mxu0 0.0
        %935 = vmatpush1.msra.mxu0 0.0
        %936 = vmatprep.subr.mxu0 0.0
        %937 = vmatpush1.msra.mxu0 %v467
        %938 = vmatprep.subr.mxu0 0.0
        %939 = vmatpush2.msra.mxu0 0.0
        %940 = vmatprep.subr.mxu0 0.0
        %941 = vmatpush2.msra.mxu0 0.0
        %942 = vmatprep.subr.mxu0 0.0
        %943 = vmatpush2.msra.mxu0 0.0
        %944 = vmatprep.subr.mxu0 0.0
        %945 = vmatpush2.msra.mxu0 0.0
        %946 = vmatprep.subr.mxu0 0.0
        %947 = vmatpush2.msra.mxu0 0.0
        %948 = vmatprep.subr.mxu0 0.0
        %949 = vmatpush2.msra.mxu0 0.0
        %950 = vmatprep.subr.mxu0 0.0
        %951 = vmatpush2.msra.mxu0 0.0
        %952 = vmatprep.subr.mxu0 0.0
        %953 = vmatpush2.msra.mxu0 0.0
        %954 = vmatprep.subr.mxu0 0.0
        %955 = vmatpush2.msra.mxu0 0.0
        %956 = vmatprep.subr.mxu0 0.0
        %957 = vmatpush2.msra.mxu0 0.0
        %958 = vmatprep.subr.mxu0 0.0
        %959 = vmatpush2.msra.mxu0 0.0
        %960 = vmatprep.subr.mxu0 0.0
        %961 = vmatpush2.msra.mxu0 0.0
        %962 = vmatprep.subr.mxu0 0.0
        %963 = vmatpush2.msra.mxu0 0.0
        %964 = vmatprep.subr.mxu0 0.0
        %965 = vmatpush2.msra.mxu0 0.0
        %966 = vmatprep.subr.mxu0 0.0
        %967 = vmatpush2.msra.mxu0 0.0
        %968 = vmatprep.subr.mxu0 0.0
        %969 = vmatpush2.msra.mxu0 0.0
        %970 = vmatprep.mubr.f32.mxu0 0.0
        %971 = vmatmul.mubr.f32.gmra.mxu0 %v904
        %v972 = vpop.f32.mrf.mxu0
        %v973 = vadd.f32 0.0, %v972
        %v974 = vpop.f32.mrf.mxu0
        %975 = vdwg.mxu0
        %v977 = vsel %vm477, %v824, 0
        %979 = vmatprep.subr.mxu0 0.0
        %980 = vmatpush1.msra.mxu0 0.0
        %981 = vmatprep.subr.mxu0 0.0
        %982 = vmatpush1.msra.mxu0 0.0
        %983 = vmatprep.subr.mxu0 0.0
        %984 = vmatpush1.msra.mxu0 0.0
        %985 = vmatprep.subr.mxu0 0.0
        %986 = vmatpush1.msra.mxu0 0.0
        %987 = vmatprep.subr.mxu0 0.0
        %988 = vmatpush1.msra.mxu0 0.0
        %989 = vmatprep.subr.mxu0 0.0
        %990 = vmatpush1.msra.mxu0 0.0
        %991 = vmatprep.subr.mxu0 0.0
        %992 = vmatpush1.msra.mxu0 0.0
        %993 = vmatprep.subr.mxu0 0.0
        %994 = vmatpush1.msra.mxu0 0.0
        %995 = vmatprep.subr.mxu0 0.0
        %996 = vmatpush1.msra.mxu0 0.0
        %997 = vmatprep.subr.mxu0 0.0
        %998 = vmatpush1.msra.mxu0 0.0
        %999 = vmatprep.subr.mxu0 0.0
        %1000 = vmatpush1.msra.mxu0 0.0
        %1001 = vmatprep.subr.mxu0 0.0
        %1002 = vmatpush1.msra.mxu0 0.0
        %1003 = vmatprep.subr.mxu0 0.0
        %1004 = vmatpush1.msra.mxu0 0.0
        %1005 = vmatprep.subr.mxu0 0.0
        %1006 = vmatpush1.msra.mxu0 0.0
        %1007 = vmatprep.subr.mxu0 0.0
        %1008 = vmatpush1.msra.mxu0 0.0
        %1009 = vmatprep.subr.mxu0 0.0
        %1010 = vmatpush1.msra.mxu0 %v468
        %1011 = vmatprep.subr.mxu0 0.0
        %1012 = vmatpush2.msra.mxu0 0.0
        %1013 = vmatprep.subr.mxu0 0.0
        %1014 = vmatpush2.msra.mxu0 0.0
        %1015 = vmatprep.subr.mxu0 0.0
        %1016 = vmatpush2.msra.mxu0 0.0
        %1017 = vmatprep.subr.mxu0 0.0
        %1018 = vmatpush2.msra.mxu0 0.0
        %1019 = vmatprep.subr.mxu0 0.0
        %1020 = vmatpush2.msra.mxu0 0.0
        %1021 = vmatprep.subr.mxu0 0.0
        %1022 = vmatpush2.msra.mxu0 0.0
        %1023 = vmatprep.subr.mxu0 0.0
        %1024 = vmatpush2.msra.mxu0 0.0
        %1025 = vmatprep.subr.mxu0 0.0
        %1026 = vmatpush2.msra.mxu0 0.0
        %1027 = vmatprep.subr.mxu0 0.0
        %1028 = vmatpush2.msra.mxu0 0.0
        %1029 = vmatprep.subr.mxu0 0.0
        %1030 = vmatpush2.msra.mxu0 0.0
        %1031 = vmatprep.subr.mxu0 0.0
        %1032 = vmatpush2.msra.mxu0 0.0
        %1033 = vmatprep.subr.mxu0 0.0
        %1034 = vmatpush2.msra.mxu0 0.0
        %1035 = vmatprep.subr.mxu0 0.0
        %1036 = vmatpush2.msra.mxu0 0.0
        %1037 = vmatprep.subr.mxu0 0.0
        %1038 = vmatpush2.msra.mxu0 0.0
        %1039 = vmatprep.subr.mxu0 0.0
        %1040 = vmatpush2.msra.mxu0 0.0
        %1041 = vmatprep.subr.mxu0 0.0
        %1042 = vmatpush2.msra.mxu0 0.0
        %1043 = vmatprep.mubr.f32.mxu0 0.0
        %1044 = vmatmul.mubr.f32.gmra.mxu0 %v977
        %v1045 = vpop.f32.mrf.mxu0
        %v1046 = vadd.f32 0.0, %v1045
        %v1047 = vpop.f32.mrf.mxu0
        %1048 = vdwg.mxu0
        %v1050 = vsel %vm477, %v825, 0
        %1052 = vmatprep.subr.mxu0 0.0
        %1053 = vmatpush1.msra.mxu0 0.0
        %1054 = vmatprep.subr.mxu0 0.0
        %1055 = vmatpush1.msra.mxu0 0.0
        %1056 = vmatprep.subr.mxu0 0.0
        %1057 = vmatpush1.msra.mxu0 0.0
        %1058 = vmatprep.subr.mxu0 0.0
        %1059 = vmatpush1.msra.mxu0 0.0
        %1060 = vmatprep.subr.mxu0 0.0
        %1061 = vmatpush1.msra.mxu0 0.0
        %1062 = vmatprep.subr.mxu0 0.0
        %1063 = vmatpush1.msra.mxu0 0.0
        %1064 = vmatprep.subr.mxu0 0.0
        %1065 = vmatpush1.msra.mxu0 0.0
        %1066 = vmatprep.subr.mxu0 0.0
        %1067 = vmatpush1.msra.mxu0 0.0
        %1068 = vmatprep.subr.mxu0 0.0
        %1069 = vmatpush1.msra.mxu0 0.0
        %1070 = vmatprep.subr.mxu0 0.0
        %1071 = vmatpush1.msra.mxu0 0.0
        %1072 = vmatprep.subr.mxu0 0.0
        %1073 = vmatpush1.msra.mxu0 0.0
        %1074 = vmatprep.subr.mxu0 0.0
        %1075 = vmatpush1.msra.mxu0 0.0
        %1076 = vmatprep.subr.mxu0 0.0
        %1077 = vmatpush1.msra.mxu0 0.0
        %1078 = vmatprep.subr.mxu0 0.0
        %1079 = vmatpush1.msra.mxu0 0.0
        %1080 = vmatprep.subr.mxu0 0.0
        %1081 = vmatpush1.msra.mxu0 0.0
        %1082 = vmatprep.subr.mxu0 0.0
        %1083 = vmatpush1.msra.mxu0 %v469
        %1084 = vmatprep.subr.mxu0 0.0
        %1085 = vmatpush2.msra.mxu0 0.0
        %1086 = vmatprep.subr.mxu0 0.0
        %1087 = vmatpush2.msra.mxu0 0.0
        %1088 = vmatprep.subr.mxu0 0.0
        %1089 = vmatpush2.msra.mxu0 0.0
        %1090 = vmatprep.subr.mxu0 0.0
        %1091 = vmatpush2.msra.mxu0 0.0
        %1092 = vmatprep.subr.mxu0 0.0
        %1093 = vmatpush2.msra.mxu0 0.0
        %1094 = vmatprep.subr.mxu0 0.0
        %1095 = vmatpush2.msra.mxu0 0.0
        %1096 = vmatprep.subr.mxu0 0.0
        %1097 = vmatpush2.msra.mxu0 0.0
        %1098 = vmatprep.subr.mxu0 0.0
        %1099 = vmatpush2.msra.mxu0 0.0
        %1100 = vmatprep.subr.mxu0 0.0
        %1101 = vmatpush2.msra.mxu0 0.0
        %1102 = vmatprep.subr.mxu0 0.0
        %1103 = vmatpush2.msra.mxu0 0.0
        %1104 = vmatprep.subr.mxu0 0.0
        %1105 = vmatpush2.msra.mxu0 0.0
        %1106 = vmatprep.subr.mxu0 0.0
        %1107 = vmatpush2.msra.mxu0 0.0
        %1108 = vmatprep.subr.mxu0 0.0
        %1109 = vmatpush2.msra.mxu0 0.0
        %1110 = vmatprep.subr.mxu0 0.0
        %1111 = vmatpush2.msra.mxu0 0.0
        %1112 = vmatprep.subr.mxu0 0.0
        %1113 = vmatpush2.msra.mxu0 0.0
        %1114 = vmatprep.subr.mxu0 0.0
        %1115 = vmatpush2.msra.mxu0 0.0
        %1116 = vmatprep.mubr.f32.mxu0 0.0
        %1117 = vmatmul.mubr.f32.gmra.mxu0 %v1050
        %v1118 = vpop.f32.mrf.mxu0
        %v1119 = vadd.f32 0.0, %v1118
        %v1120 = vpop.f32.mrf.mxu0
        %1121 = vdwg.mxu0
        %s1122 = smul.u32 %s39, 4
        %s1123 = smul.u32 %s1122, 8
        %s1124 = scalar_lea.vmem [#allocation8], %s1123
        %v1125 = vld [vmem:[%s1124] sm:$0xff]
        %s1126 = sadd.s32 %s1122, 1
        %s1127 = smul.u32 %s1126, 8
        %s1128 = scalar_lea.vmem [#allocation8], %s1127
        %v1129 = vld [vmem:[%s1128] sm:$0xff]
        %v1131 = vsel %vm477, %v973, 0
        %1133 = vmatprep.subr.mxu0 0.0
        %1134 = vmatpush1.msra.mxu0 0.0
        %1135 = vmatprep.subr.mxu0 0.0
        %1136 = vmatpush1.msra.mxu0 0.0
        %1137 = vmatprep.subr.mxu0 0.0
        %1138 = vmatpush1.msra.mxu0 0.0
        %1139 = vmatprep.subr.mxu0 0.0
        %1140 = vmatpush1.msra.mxu0 0.0
        %1141 = vmatprep.subr.mxu0 0.0
        %1142 = vmatpush1.msra.mxu0 0.0
        %1143 = vmatprep.subr.mxu0 0.0
        %1144 = vmatpush1.msra.mxu0 0.0
        %1145 = vmatprep.subr.mxu0 0.0
        %1146 = vmatpush1.msra.mxu0 0.0
        %1147 = vmatprep.subr.mxu0 0.0
        %1148 = vmatpush1.msra.mxu0 0.0
        %1149 = vmatprep.subr.mxu0 0.0
        %1150 = vmatpush1.msra.mxu0 0.0
        %1151 = vmatprep.subr.mxu0 0.0
        %1152 = vmatpush1.msra.mxu0 0.0
        %1153 = vmatprep.subr.mxu0 0.0
        %1154 = vmatpush1.msra.mxu0 0.0
        %1155 = vmatprep.subr.mxu0 0.0
        %1156 = vmatpush1.msra.mxu0 0.0
        %1157 = vmatprep.subr.mxu0 0.0
        %1158 = vmatpush1.msra.mxu0 0.0
        %1159 = vmatprep.subr.mxu0 0.0
        %1160 = vmatpush1.msra.mxu0 0.0
        %1161 = vmatprep.subr.mxu0 0.0
        %1162 = vmatpush1.msra.mxu0 0.0
        %1163 = vmatprep.subr.mxu0 0.0
        %1164 = vmatpush1.msra.mxu0 %v1129
        %1165 = vmatprep.subr.mxu0 0.0
        %1166 = vmatpush2.msra.mxu0 0.0
        %1167 = vmatprep.subr.mxu0 0.0
        %1168 = vmatpush2.msra.mxu0 0.0
        %1169 = vmatprep.subr.mxu0 0.0
        %1170 = vmatpush2.msra.mxu0 0.0
        %1171 = vmatprep.subr.mxu0 0.0
        %1172 = vmatpush2.msra.mxu0 0.0
        %1173 = vmatprep.subr.mxu0 0.0
        %1174 = vmatpush2.msra.mxu0 0.0
        %1175 = vmatprep.subr.mxu0 0.0
        %1176 = vmatpush2.msra.mxu0 0.0
        %1177 = vmatprep.subr.mxu0 0.0
        %1178 = vmatpush2.msra.mxu0 0.0
        %1179 = vmatprep.subr.mxu0 0.0
        %1180 = vmatpush2.msra.mxu0 0.0
        %1181 = vmatprep.subr.mxu0 0.0
        %1182 = vmatpush2.msra.mxu0 0.0
        %1183 = vmatprep.subr.mxu0 0.0
        %1184 = vmatpush2.msra.mxu0 0.0
        %1185 = vmatprep.subr.mxu0 0.0
        %1186 = vmatpush2.msra.mxu0 0.0
        %1187 = vmatprep.subr.mxu0 0.0
        %1188 = vmatpush2.msra.mxu0 0.0
        %1189 = vmatprep.subr.mxu0 0.0
        %1190 = vmatpush2.msra.mxu0 0.0
        %1191 = vmatprep.subr.mxu0 0.0
        %1192 = vmatpush2.msra.mxu0 0.0
        %1193 = vmatprep.subr.mxu0 0.0
        %1194 = vmatpush2.msra.mxu0 0.0
        %1195 = vmatprep.subr.mxu0 0.0
        %1196 = vmatpush2.msra.mxu0 0.0
        %1197 = vmatprep.mubr.f32.mxu0 0.0
        %1198 = vmatmul.mubr.f32.gmra.mxu0 %v1131
        %v1199 = vpop.f32.mrf.mxu0
        %v1200 = vadd.f32 0.0, %v1199
        %v1201 = vpop.f32.mrf.mxu0
        %1202 = vdwg.mxu0
        %v1204 = vsel %vm477, %v900, 0
        %1206 = vmatprep.subr.mxu0 0.0
        %1207 = vmatpush1.msra.mxu0 0.0
        %1208 = vmatprep.subr.mxu0 0.0
        %1209 = vmatpush1.msra.mxu0 0.0
        %1210 = vmatprep.subr.mxu0 0.0
        %1211 = vmatpush1.msra.mxu0 0.0
        %1212 = vmatprep.subr.mxu0 0.0
        %1213 = vmatpush1.msra.mxu0 0.0
        %1214 = vmatprep.subr.mxu0 0.0
        %1215 = vmatpush1.msra.mxu0 0.0
        %1216 = vmatprep.subr.mxu0 0.0
        %1217 = vmatpush1.msra.mxu0 0.0
        %1218 = vmatprep.subr.mxu0 0.0
        %1219 = vmatpush1.msra.mxu0 0.0
        %1220 = vmatprep.subr.mxu0 0.0
        %1221 = vmatpush1.msra.mxu0 0.0
        %1222 = vmatprep.subr.mxu0 0.0
        %1223 = vmatpush1.msra.mxu0 0.0
        %1224 = vmatprep.subr.mxu0 0.0
        %1225 = vmatpush1.msra.mxu0 0.0
        %1226 = vmatprep.subr.mxu0 0.0
        %1227 = vmatpush1.msra.mxu0 0.0
        %1228 = vmatprep.subr.mxu0 0.0
        %1229 = vmatpush1.msra.mxu0 0.0
        %1230 = vmatprep.subr.mxu0 0.0
        %1231 = vmatpush1.msra.mxu0 0.0
        %1232 = vmatprep.subr.mxu0 0.0
        %1233 = vmatpush1.msra.mxu0 0.0
        %1234 = vmatprep.subr.mxu0 0.0
        %1235 = vmatpush1.msra.mxu0 0.0
        %1236 = vmatprep.subr.mxu0 0.0
        %1237 = vmatpush1.msra.mxu0 %v1125
        %1238 = vmatprep.subr.mxu0 0.0
        %1239 = vmatpush2.msra.mxu0 0.0
        %1240 = vmatprep.subr.mxu0 0.0
        %1241 = vmatpush2.msra.mxu0 0.0
        %1242 = vmatprep.subr.mxu0 0.0
        %1243 = vmatpush2.msra.mxu0 0.0
        %1244 = vmatprep.subr.mxu0 0.0
        %1245 = vmatpush2.msra.mxu0 0.0
        %1246 = vmatprep.subr.mxu0 0.0
        %1247 = vmatpush2.msra.mxu0 0.0
        %1248 = vmatprep.subr.mxu0 0.0
        %1249 = vmatpush2.msra.mxu0 0.0
        %1250 = vmatprep.subr.mxu0 0.0
        %1251 = vmatpush2.msra.mxu0 0.0
        %1252 = vmatprep.subr.mxu0 0.0
        %1253 = vmatpush2.msra.mxu0 0.0
        %1254 = vmatprep.subr.mxu0 0.0
        %1255 = vmatpush2.msra.mxu0 0.0
        %1256 = vmatprep.subr.mxu0 0.0
        %1257 = vmatpush2.msra.mxu0 0.0
        %1258 = vmatprep.subr.mxu0 0.0
        %1259 = vmatpush2.msra.mxu0 0.0
        %1260 = vmatprep.subr.mxu0 0.0
        %1261 = vmatpush2.msra.mxu0 0.0
        %1262 = vmatprep.subr.mxu0 0.0
        %1263 = vmatpush2.msra.mxu0 0.0
        %1264 = vmatprep.subr.mxu0 0.0
        %1265 = vmatpush2.msra.mxu0 0.0
        %1266 = vmatprep.subr.mxu0 0.0
        %1267 = vmatpush2.msra.mxu0 0.0
        %1268 = vmatprep.subr.mxu0 0.0
        %1269 = vmatpush2.msra.mxu0 0.0
        %1270 = vmatprep.mubr.f32.mxu0 0.0
        %1271 = vmatmul.mubr.f32.gmra.mxu0 %v1204
        %v1272 = vpop.f32.mrf.mxu0
        %v1273 = vadd.f32 %v1200, %v1272
        %v1274 = vpop.f32.mrf.mxu0
        %1275 = vdwg.mxu0
        %s1276 = sadd.s32 %s1122, 2
        %s1277 = smul.u32 %s1276, 8
        %s1278 = scalar_lea.vmem [#allocation8], %s1277
        %v1279 = vld [vmem:[%s1278] sm:$0xff]
        %v1281 = vsel %vm477, %v1046, 0
        %1283 = vmatprep.subr.mxu0 0.0
        %1284 = vmatpush1.msra.mxu0 0.0
        %1285 = vmatprep.subr.mxu0 0.0
        %1286 = vmatpush1.msra.mxu0 0.0
        %1287 = vmatprep.subr.mxu0 0.0
        %1288 = vmatpush1.msra.mxu0 0.0
        %1289 = vmatprep.subr.mxu0 0.0
        %1290 = vmatpush1.msra.mxu0 0.0
        %1291 = vmatprep.subr.mxu0 0.0
        %1292 = vmatpush1.msra.mxu0 0.0
        %1293 = vmatprep.subr.mxu0 0.0
        %1294 = vmatpush1.msra.mxu0 0.0
        %1295 = vmatprep.subr.mxu0 0.0
        %1296 = vmatpush1.msra.mxu0 0.0
        %1297 = vmatprep.subr.mxu0 0.0
        %1298 = vmatpush1.msra.mxu0 0.0
        %1299 = vmatprep.subr.mxu0 0.0
        %1300 = vmatpush1.msra.mxu0 0.0
        %1301 = vmatprep.subr.mxu0 0.0
        %1302 = vmatpush1.msra.mxu0 0.0
        %1303 = vmatprep.subr.mxu0 0.0
        %1304 = vmatpush1.msra.mxu0 0.0
        %1305 = vmatprep.subr.mxu0 0.0
        %1306 = vmatpush1.msra.mxu0 0.0
        %1307 = vmatprep.subr.mxu0 0.0
        %1308 = vmatpush1.msra.mxu0 0.0
        %1309 = vmatprep.subr.mxu0 0.0
        %1310 = vmatpush1.msra.mxu0 0.0
        %1311 = vmatprep.subr.mxu0 0.0
        %1312 = vmatpush1.msra.mxu0 0.0
        %1313 = vmatprep.subr.mxu0 0.0
        %1314 = vmatpush1.msra.mxu0 %v1279
        %1315 = vmatprep.subr.mxu0 0.0
        %1316 = vmatpush2.msra.mxu0 0.0
        %1317 = vmatprep.subr.mxu0 0.0
        %1318 = vmatpush2.msra.mxu0 0.0
        %1319 = vmatprep.subr.mxu0 0.0
        %1320 = vmatpush2.msra.mxu0 0.0
        %1321 = vmatprep.subr.mxu0 0.0
        %1322 = vmatpush2.msra.mxu0 0.0
        %1323 = vmatprep.subr.mxu0 0.0
        %1324 = vmatpush2.msra.mxu0 0.0
        %1325 = vmatprep.subr.mxu0 0.0
        %1326 = vmatpush2.msra.mxu0 0.0
        %1327 = vmatprep.subr.mxu0 0.0
        %1328 = vmatpush2.msra.mxu0 0.0
        %1329 = vmatprep.subr.mxu0 0.0
        %1330 = vmatpush2.msra.mxu0 0.0
        %1331 = vmatprep.subr.mxu0 0.0
        %1332 = vmatpush2.msra.mxu0 0.0
        %1333 = vmatprep.subr.mxu0 0.0
        %1334 = vmatpush2.msra.mxu0 0.0
        %1335 = vmatprep.subr.mxu0 0.0
        %1336 = vmatpush2.msra.mxu0 0.0
        %1337 = vmatprep.subr.mxu0 0.0
        %1338 = vmatpush2.msra.mxu0 0.0
        %1339 = vmatprep.subr.mxu0 0.0
        %1340 = vmatpush2.msra.mxu0 0.0
        %1341 = vmatprep.subr.mxu0 0.0
        %1342 = vmatpush2.msra.mxu0 0.0
        %1343 = vmatprep.subr.mxu0 0.0
        %1344 = vmatpush2.msra.mxu0 0.0
        %1345 = vmatprep.subr.mxu0 0.0
        %1346 = vmatpush2.msra.mxu0 0.0
        %1347 = vmatprep.mubr.f32.mxu0 0.0
        %1348 = vmatmul.mubr.f32.gmra.mxu0 %v1281
        %v1349 = vpop.f32.mrf.mxu0
        %v1350 = vadd.f32 0.0, %v1349
        %v1351 = vpop.f32.mrf.mxu0
        %1352 = vdwg.mxu0
        %v1353 = vadd.f32 %v1273, %v1350
        %s1354 = sadd.s32 %s1122, 3
        %s1355 = smul.u32 %s1354, 8
        %s1356 = scalar_lea.vmem [#allocation8], %s1355
        %v1357 = vld [vmem:[%s1356] sm:$0xff]
        %v1359 = vsel %vm477, %v1119, 0
        %1361 = vmatprep.subr.mxu0 0.0
        %1362 = vmatpush1.msra.mxu0 0.0
        %1363 = vmatprep.subr.mxu0 0.0
        %1364 = vmatpush1.msra.mxu0 0.0
        %1365 = vmatprep.subr.mxu0 0.0
        %1366 = vmatpush1.msra.mxu0 0.0
        %1367 = vmatprep.subr.mxu0 0.0
        %1368 = vmatpush1.msra.mxu0 0.0
        %1369 = vmatprep.subr.mxu0 0.0
        %1370 = vmatpush1.msra.mxu0 0.0
        %1371 = vmatprep.subr.mxu0 0.0
        %1372 = vmatpush1.msra.mxu0 0.0
        %1373 = vmatprep.subr.mxu0 0.0
        %1374 = vmatpush1.msra.mxu0 0.0
        %1375 = vmatprep.subr.mxu0 0.0
        %1376 = vmatpush1.msra.mxu0 0.0
        %1377 = vmatprep.subr.mxu0 0.0
        %1378 = vmatpush1.msra.mxu0 0.0
        %1379 = vmatprep.subr.mxu0 0.0
        %1380 = vmatpush1.msra.mxu0 0.0
        %1381 = vmatprep.subr.mxu0 0.0
        %1382 = vmatpush1.msra.mxu0 0.0
        %1383 = vmatprep.subr.mxu0 0.0
        %1384 = vmatpush1.msra.mxu0 0.0
        %1385 = vmatprep.subr.mxu0 0.0
        %1386 = vmatpush1.msra.mxu0 0.0
        %1387 = vmatprep.subr.mxu0 0.0
        %1388 = vmatpush1.msra.mxu0 0.0
        %1389 = vmatprep.subr.mxu0 0.0
        %1390 = vmatpush1.msra.mxu0 0.0
        %1391 = vmatprep.subr.mxu0 0.0
        %1392 = vmatpush1.msra.mxu0 %v1357
        %1393 = vmatprep.subr.mxu0 0.0
        %1394 = vmatpush2.msra.mxu0 0.0
        %1395 = vmatprep.subr.mxu0 0.0
        %1396 = vmatpush2.msra.mxu0 0.0
        %1397 = vmatprep.subr.mxu0 0.0
        %1398 = vmatpush2.msra.mxu0 0.0
        %1399 = vmatprep.subr.mxu0 0.0
        %1400 = vmatpush2.msra.mxu0 0.0
        %1401 = vmatprep.subr.mxu0 0.0
        %1402 = vmatpush2.msra.mxu0 0.0
        %1403 = vmatprep.subr.mxu0 0.0
        %1404 = vmatpush2.msra.mxu0 0.0
        %1405 = vmatprep.subr.mxu0 0.0
        %1406 = vmatpush2.msra.mxu0 0.0
        %1407 = vmatprep.subr.mxu0 0.0
        %1408 = vmatpush2.msra.mxu0 0.0
        %1409 = vmatprep.subr.mxu0 0.0
        %1410 = vmatpush2.msra.mxu0 0.0
        %1411 = vmatprep.subr.mxu0 0.0
        %1412 = vmatpush2.msra.mxu0 0.0
        %1413 = vmatprep.subr.mxu0 0.0
        %1414 = vmatpush2.msra.mxu0 0.0
        %1415 = vmatprep.subr.mxu0 0.0
        %1416 = vmatpush2.msra.mxu0 0.0
        %1417 = vmatprep.subr.mxu0 0.0
        %1418 = vmatpush2.msra.mxu0 0.0
        %1419 = vmatprep.subr.mxu0 0.0
        %1420 = vmatpush2.msra.mxu0 0.0
        %1421 = vmatprep.subr.mxu0 0.0
        %1422 = vmatpush2.msra.mxu0 0.0
        %1423 = vmatprep.subr.mxu0 0.0
        %1424 = vmatpush2.msra.mxu0 0.0
        %1425 = vmatprep.mubr.f32.mxu0 0.0
        %1426 = vmatmul.mubr.f32.gmra.mxu0 %v1359
        %v1427 = vpop.f32.mrf.mxu0
        %v1428 = vadd.f32 0.0, %v1427
        %v1429 = vpop.f32.mrf.mxu0
        %1430 = vdwg.mxu0
        %v1431 = vadd.f32 %v1353, %v1428
        %p1432 = scmp.eq.s32.totalorder %s39, 0
        // Predicated region
        $region61: #{tpu_custom_call.1} parent=43 // pred_check
          %p1433 = pneg %p1432
        $region62: #{tpu_custom_call.1} parent=43 // pred_check_branch
          %1435 = sbr.rel (%p1433) target = $region64
        $region63: #{tpu_custom_call.1} parent=43 // pred_region
          %v1436 = vld [vmem:[%s5] sm:$0x1]
          %v1438 = vlaneseq
          %v1439 = vshrl.u32 %v1438, 7
          %v1440 = vsub.s32 0, %v1439
          %v1441 = vrot.slane %v1436, %v1440
          %vm1443 = vcmask 261120
          %1444 = vst.msk [vmem:[%s443] sm:$0xff] %vm1443, %v1441
        $region64: #{tpu_custom_call.1} parent=43 // pred_fallthru
          _
        %v1445 = vld [vmem:[%s443] sm:$0xff]
        %v1446 = vadd.f32 %v1445, %v1431
        %vm1447 = vcmask 261120
        %1448 = vst.msk [vmem:[%s443] sm:$0xff] %vm1447, %v1446
        %s1449 = sand.u32 %s215, 1
        %s1450 = scalar_lea.sflag [#allocation4], %s1449
        %s1451 = sand.u32 %s215, 1
        %s1452 = smul.addr %s1451, 8
        %s1453 = scalar_lea.vmem [#allocation10], %s1452
        %s1454 = sand.u32 %s245, 1
        %s1455 = scalar_lea.sflag [#allocation12], %s1454
        %s1456 = sand.u32 %s245, 1
        %s1457 = smul.addr %s1456, 32
        %s1458 = scalar_lea.vmem [#allocation11], %s1457
        // Predicated region
        $region65: #{tpu_custom_call.1} parent=43 // pred_check
          %p1459 = pneg %p225
        $region66: #{tpu_custom_call.1} parent=43 // pred_check_branch
          %1461 = sbr.rel (%p1459) target = $region68
        $region67: #{tpu_custom_call.1} parent=43 // pred_region
          %s1463 = ssub.s32 128, 128
          %1464 = vsyncadd %s1450, %s1463
          %s1465 = sadd.s32 %s38, %s37
          %s1466 = smul.addr %s1465, 128
          %s1467 = scalar_lea.hbm %s6, %s1466
          %s1469 = sshll.u32 %s1453, 4
          %s1470 = int_to_ptr.vmem [resolvable:$true] %s1469
          %1472 = dma.vmem_to_hbm [thread:$0]  %s1470, 128, %s1467, %s1450
        $region68: #{tpu_custom_call.1} parent=43 // pred_fallthru
          _
        // Predicated region
        $region69: #{tpu_custom_call.1} parent=43 // pred_check
          %p1473 = pneg %p255
        $region70: #{tpu_custom_call.1} parent=43 // pred_check_branch
          %1475 = sbr.rel (%p1473) target = $region72
        $region71: #{tpu_custom_call.1} parent=43 // pred_region
          %s1476 = smul.u32 4, %s39
          %s1478 = ssub.s32 512, 512
          %1479 = vsyncadd %s1455, %s1478
          %s1480 = sadd.s32 %s38, %s1476
          %s1481 = smul.addr %s37, 4
          %s1482 = sadd.s32 %s1480, %s1481
          %s1483 = smul.addr %s1482, 128
          %s1484 = scalar_lea.hbm %s7, %s1483
          %s1485 = sshll.u32 %s1458, 4
          %s1486 = int_to_ptr.vmem [resolvable:$true] %s1485
          %1491 = dma.vmem_to_hbm [thread:$0]  %s1486, 512, %s1484, %s1455, 128, 128, 8
        $region72: #{tpu_custom_call.1} parent=43 // pred_fallthru
          _
      $region44: #{tpu_custom_call.1} parent=5 // pred_fallthru
        _
      %p1492 = scmp.le.s32.totalorder 2, %s27
      // Predicated region
      $region73: #{tpu_custom_call.1} parent=5 // pred_check
        %p1493 = pneg %p1492
      $region74: #{tpu_custom_call.1} parent=5 // pred_check_branch
        %1495 = sbr.rel (%p1493) target = $region76
      $region75: #{tpu_custom_call.1} parent=5 // pred_region
        %s1496 = ssub.s32 %s27, 2
        // Predicated region
        $region77: #{tpu_custom_call.1} parent=75 // pred_check
          %p1497 = pneg %p231
        $region78: #{tpu_custom_call.1} parent=75 // pred_check_branch
          %1499 = sbr.rel (%p1497) target = $region80
        $region79: #{tpu_custom_call.1} parent=75 // pred_region
          %s1500 = sand.u32 %s216, 1
          %s1501 = scalar_lea.sflag [#allocation4], %s1500
          %s1502 = sand.u32 %s216, 1
          %s1503 = smul.addr %s1502, 8
          %s1504 = scalar_lea.vmem [#allocation10], %s1503
          %1505 = dma.done %s1501, 128
        $region80: #{tpu_custom_call.1} parent=75 // pred_fallthru
          _
        // Predicated region
        $region81: #{tpu_custom_call.1} parent=75 // pred_check
          %p1506 = pneg %p261
        $region82: #{tpu_custom_call.1} parent=75 // pred_check_branch
          %1508 = sbr.rel (%p1506) target = $region84
        $region83: #{tpu_custom_call.1} parent=75 // pred_region
          %s1509 = sand.u32 %s246, 1
          %s1510 = scalar_lea.sflag [#allocation12], %s1509
          %s1511 = sand.u32 %s246, 1
          %s1512 = smul.addr %s1511, 32
          %s1513 = scalar_lea.vmem [#allocation11], %s1512
          %1514 = dma.done %s1510, 512
        $region84: #{tpu_custom_call.1} parent=75 // pred_fallthru
          _
      $region76: #{tpu_custom_call.1} parent=5 // pred_fallthru
        _
    $region6: #{tpu_custom_call.1} parent=1 // loop_footer
      %s31 = sadd.s32 1, %s27
    $region7: #{tpu_custom_call.1} parent=1 // loop_footer_branch
      %26 = sbr.rel target = $region3
    $region8: #{tpu_custom_call.1} parent=1 // loop_exit
      _
    %1515 = vsyncpa [#allocation3], 1
    %s1516 = scalar_lea.sflag [#allocation3], 1
    %1517 = vsyncpa %s1516, 1
    %1518 = vsyncpa [#allocation6], 1
    %s1519 = scalar_lea.sflag [#allocation6], 1
    %1520 = vsyncpa %s1519, 1
    %1521 = vsyncpa [#allocation9], 1
    %1522 = vsyncpa [#allocation4], 1
    %s1523 = scalar_lea.sflag [#allocation4], 1
    %1524 = vsyncpa %s1523, 1
    %1525 = vsyncpa [#allocation12], 1
    %s1526 = scalar_lea.sflag [#allocation12], 1
    %1527 = vsyncpa %s1526, 1

</llo_original>
